<compile_context>
chip_gen: v7x
topology: tpu7x:2x2x1
jax: 0.10.0
libtpu: 0.0.40
codegen_flags: <defaults>
</compile_context>

<pallas_src>
import functools

import jax
import jax.numpy as jnp
from jax.experimental import pallas as pl
from jax.experimental.pallas import tpu as pltpu

LANE = 128


def _round_up(x, m):
    return (x + m - 1) // m * m


def dual_attention_kernel(v_ref, e_ref, w1_ref, b1_ref, w2_ref, b2_ref, o_ref,
                          *, inv_hidden):
    rows = v_ref.shape[0]              # batch_tile * feature_pad
    fp, hp = e_ref.shape
    reps = rows // fp

    # embedding[(b, f), h] = V[b, f] * E[f, h]
    e_tiled = jnp.tile(e_ref[...], (reps, 1))             # (rows, hp), layout-preserving
    emb = v_ref[...] * e_tiled                            # (rows, hp)

    # attention = sigmoid(relu(emb @ W1 + b1) @ W2 + b2)
    h1 = jnp.dot(emb, w1_ref[...], preferred_element_type=jnp.float32)
    h1 = jnp.maximum(h1 + b1_ref[...], 0.0)               # relu
    logits = jnp.dot(h1, w2_ref[...], preferred_element_type=jnp.float32)
    logits = logits + b2_ref[...]
    attn = 1.0 / (1.0 + jnp.exp(-logits))                 # sigmoid (EUP exp)

    # rescale + adaptive average pool over the *true* hidden dim (padding is zero)
    pooled = jnp.sum(emb * attn, axis=-1, keepdims=True) * inv_hidden
    o_ref[...] = pooled.astype(o_ref.dtype)


def dual_attention_forward(V, E, w1, b1, w2, b2, *, batch_tile=4):
    """V: [B, feature]; E: [feature, hidden]; w1: [hidden, attn]; b1: [attn];
    w2: [attn, hidden]; b2: [hidden].  Returns [B, feature] float32."""
    B, F = V.shape
    Fe, H = E.shape
    assert Fe == F, "E first dim must equal feature size"
    A = w1.shape[1]

    Fp = _round_up(F, LANE)
    Hp = _round_up(H, LANE)
    Ap = _round_up(A, LANE)
    Bp = _round_up(B, batch_tile)

    f32 = jnp.float32
    # Zero-pad everything to lane width (zeros are exact no-ops for the result).
    Vp = jnp.zeros((Bp, Fp), f32).at[:B, :F].set(V.astype(f32))
    Ep = jnp.zeros((Fp, Hp), f32).at[:F, :H].set(E.astype(f32))
    W1p = jnp.zeros((Hp, Ap), f32).at[:H, :A].set(w1.astype(f32))
    B1p = jnp.zeros((1, Ap), f32).at[:, :A].set(b1.astype(f32).reshape(1, A))
    W2p = jnp.zeros((Ap, Hp), f32).at[:A, :H].set(w2.astype(f32))
    B2p = jnp.zeros((1, Hp), f32).at[:, :H].set(b2.astype(f32).reshape(1, H))

    # Flatten (batch, feature) pairs into rows: one V scalar per row, kept as a column.
    v_col = Vp.reshape(Bp * Fp, 1)

    rows_per_step = batch_tile * Fp
    total_rows = Bp * Fp
    grid = (Bp // batch_tile,)

    kernel = functools.partial(dual_attention_kernel, inv_hidden=1.0 / H)

    cost = pl.CostEstimate(
        flops=4 * total_rows * Hp * Ap,                  # two MXU matmuls
        transcendentals=total_rows * Hp,                 # sigmoid exp
        bytes_accessed=4 * (2 * total_rows + Fp * Hp + Hp * Ap + Ap + Ap * Hp + Hp),
    )

    out_flat = pl.pallas_call(
        kernel,
        out_shape=jax.ShapeDtypeStruct((total_rows, 1), f32),
        grid_spec=pltpu.PrefetchScalarGridSpec(
            num_scalar_prefetch=0,
            grid=grid,
            in_specs=[
                pl.BlockSpec((rows_per_step, 1), lambda i: (i, 0)),   # V column (batch-tiled)
                pl.BlockSpec((Fp, Hp), lambda i: (0, 0)),             # E        (resident)
                pl.BlockSpec((Hp, Ap), lambda i: (0, 0)),             # W1       (resident)
                pl.BlockSpec((1, Ap), lambda i: (0, 0)),              # b1       (resident)
                pl.BlockSpec((Ap, Hp), lambda i: (0, 0)),             # W2       (resident)
                pl.BlockSpec((1, Hp), lambda i: (0, 0)),              # b2       (resident)
            ],
            out_specs=pl.BlockSpec((rows_per_step, 1), lambda i: (i, 0)),
        ),
        compiler_params=pltpu.CompilerParams(
            dimension_semantics=("parallel",),           # megacore-shard the batch grid
            vmem_limit_bytes=32 * 1024 * 1024,
        ),
        cost_estimate=cost,
    )(v_col, Ep, W1p, B1p, W2p, B2p)

    return out_flat.reshape(Bp, Fp)[:B, :F]


def init_params(key, feature_size, hidden_size, reduction_ratio, dtype=jnp.float32):
    # E ~ randn (like nn.Parameter(torch.randn(...))); F1/F2 like nn.Linear uniform init.
    attn_size = hidden_size // reduction_ratio
    kE, k1, k2, k3, k4 = jax.random.split(key, 5)
    E = jax.random.normal(kE, (feature_size, hidden_size), dtype)
    bound1 = 1.0 / (hidden_size ** 0.5)
    bound2 = 1.0 / (attn_size ** 0.5)
    w1 = jax.random.uniform(k1, (hidden_size, attn_size), dtype, -bound1, bound1)
    b1 = jax.random.uniform(k2, (attn_size,), dtype, -bound1, bound1)
    w2 = jax.random.uniform(k3, (attn_size, hidden_size), dtype, -bound2, bound2)
    b2 = jax.random.uniform(k4, (hidden_size,), dtype, -bound2, bound2)
    return E, w1, b1, w2, b2


def reference(V, E, w1, b1, w2, b2):
    # Pure-JAX reference mirroring the PyTorch forward.
    emb = V[:, :, None] * E[None, :, :]                                     # (B, F, H)
    h1 = jnp.maximum(
        jnp.einsum('bfh,ha->bfa', emb, w1,
                   precision=jax.lax.Precision.HIGHEST) + b1, 0.0)
    attn = jax.nn.sigmoid(
        jnp.einsum('bfa,ah->bfh', h1, w2,
                   precision=jax.lax.Precision.HIGHEST) + b2)
    return jnp.mean(emb * attn, axis=-1)                                     # (B, F)


if __name__ == "__main__":
    feature_size, hidden_size, reduction_ratio = 16, 32, 4
    batch = 6                                        # deliberately not a tile multiple

    key = jax.random.PRNGKey(0)
    kv, kp = jax.random.split(key)
    V = jax.random.normal(kv, (batch, feature_size), dtype=jnp.float32)
    E, w1, b1, w2, b2 = init_params(kp, feature_size, hidden_size, reduction_ratio)

    out = dual_attention_forward(V, E, w1, b1, w2, b2, batch_tile=4)
    jax.block_until_ready(out)

    ref = reference(V, E, w1, b1, w2, b2)
    assert out.shape == (batch, feature_size)
    assert jnp.allclose(out, ref, atol=1e-4, rtol=1e-4), (
        "mismatch vs reference, max abs err = %g" % float(jnp.max(jnp.abs(out - ref))))

    print("KERNEL_OK")
</pallas_src>

<mosaic_0001>
module attributes {stable_mosaic.version = 11 : i64} {
  func.func @dual_attention_kernel(%arg0: i32, %arg1: memref<512x1xf32, #tpu.memory_space<vmem>>, %arg2: memref<128x128xf32, #tpu.memory_space<vmem>>, %arg3: memref<128x128xf32, #tpu.memory_space<vmem>>, %arg4: memref<1x128xf32, #tpu.memory_space<vmem>>, %arg5: memref<128x128xf32, #tpu.memory_space<vmem>>, %arg6: memref<1x128xf32, #tpu.memory_space<vmem>>, %arg7: memref<512x1xf32, #tpu.memory_space<vmem>>) attributes {dimension_semantics = [#tpu.dimension_semantics<parallel>], iteration_bounds = array<i64: 2>, scalar_prefetch = 0 : i64, scratch_operands = 0 : i64, tpu.core_type = #tpu.core_type<tc>, window_params = [{transform_indices = @transform_0, window_bounds = array<i64: 512, 1>}, {pipeline_mode = #tpu.pipeline_mode<synchronous>, transform_indices = @transform_1, window_bounds = array<i64: 128, 128>}, {pipeline_mode = #tpu.pipeline_mode<synchronous>, transform_indices = @transform_2, window_bounds = array<i64: 128, 128>}, {pipeline_mode = #tpu.pipeline_mode<synchronous>, transform_indices = @transform_3, window_bounds = array<i64: 1, 128>}, {pipeline_mode = #tpu.pipeline_mode<synchronous>, transform_indices = @transform_4, window_bounds = array<i64: 128, 128>}, {pipeline_mode = #tpu.pipeline_mode<synchronous>, transform_indices = @transform_5, window_bounds = array<i64: 1, 128>}, {transform_indices = @transform_6, window_bounds = array<i64: 512, 1>}]} {
    %c0 = arith.constant 0 : index
    %c0_0 = arith.constant 0 : index
    %0 = vector.load %arg2[%c0, %c0_0] : memref<128x128xf32, #tpu.memory_space<vmem>>, vector<128x128xf32>
    %1 = tpu.concatenate %0, %0, %0, %0 in 0 : vector<128x128xf32>, vector<128x128xf32>, vector<128x128xf32>, vector<128x128xf32> -> vector<512x128xf32>
    %c0_1 = arith.constant 0 : index
    %c0_2 = arith.constant 0 : index
    %2 = vector.load %arg1[%c0_1, %c0_2] : memref<512x1xf32, #tpu.memory_space<vmem>>, vector<512x1xf32>
    %3 = vector.broadcast %2 : vector<512x1xf32> to vector<512x128xf32>
    %4 = arith.mulf %3, %1 : vector<512x128xf32>
    %c0_3 = arith.constant 0 : index
    %c0_4 = arith.constant 0 : index
    %5 = vector.load %arg3[%c0_3, %c0_4] : memref<128x128xf32, #tpu.memory_space<vmem>>, vector<128x128xf32>
    %cst = arith.constant dense<0.000000e+00> : vector<512x128xf32>
    %6 = tpu.matmul %4, %5, %cst {dimension_numbers = #tpu.dot_dimension_numbers<[1], [0], [0], [1], [0, 0, 1, 1], [], []>} : vector<512x128xf32>, vector<128x128xf32>, vector<512x128xf32> -> vector<512x128xf32>
    %c0_5 = arith.constant 0 : index
    %c0_6 = arith.constant 0 : index
    %7 = vector.load %arg4[%c0_5, %c0_6] : memref<1x128xf32, #tpu.memory_space<vmem>>, vector<1x128xf32>
    %8 = vector.broadcast %7 : vector<1x128xf32> to vector<512x128xf32>
    %9 = arith.addf %6, %8 : vector<512x128xf32>
    %cst_7 = arith.constant 0.000000e+00 : f32
    %10 = vector.broadcast %cst_7 : f32 to vector<512x128xf32>
    %11 = arith.maximumf %9, %10 : vector<512x128xf32>
    %c0_8 = arith.constant 0 : index
    %c0_9 = arith.constant 0 : index
    %12 = vector.load %arg5[%c0_8, %c0_9] : memref<128x128xf32, #tpu.memory_space<vmem>>, vector<128x128xf32>
    %cst_10 = arith.constant dense<0.000000e+00> : vector<512x128xf32>
    %13 = tpu.matmul %11, %12, %cst_10 {dimension_numbers = #tpu.dot_dimension_numbers<[1], [0], [0], [1], [0, 0, 1, 1], [], []>} : vector<512x128xf32>, vector<128x128xf32>, vector<512x128xf32> -> vector<512x128xf32>
    %c0_11 = arith.constant 0 : index
    %c0_12 = arith.constant 0 : index
    %14 = vector.load %arg6[%c0_11, %c0_12] : memref<1x128xf32, #tpu.memory_space<vmem>>, vector<1x128xf32>
    %15 = vector.broadcast %14 : vector<1x128xf32> to vector<512x128xf32>
    %16 = arith.addf %13, %15 : vector<512x128xf32>
    %cst_13 = arith.constant 0.000000e+00 : f32
    %17 = vector.broadcast %cst_13 : f32 to vector<512x128xf32>
    %18 = arith.subf %17, %16 : vector<512x128xf32>
    %19 = math.exp %18 : vector<512x128xf32>
    %cst_14 = arith.constant 1.000000e+00 : f32
    %20 = vector.broadcast %cst_14 : f32 to vector<512x128xf32>
    %21 = arith.addf %20, %19 : vector<512x128xf32>
    %cst_15 = arith.constant 1.000000e+00 : f32
    %22 = vector.broadcast %cst_15 : f32 to vector<512x128xf32>
    %23 = arith.divf %22, %21 : vector<512x128xf32>
    %24 = arith.mulf %4, %23 : vector<512x128xf32>
    %cst_16 = arith.constant dense<0.000000e+00> : vector<512xf32>
    %25 = vector.multi_reduction <add>, %24, %cst_16 [1] : vector<512x128xf32> to vector<512xf32>
    %26 = vector.shape_cast %25 : vector<512xf32> to vector<512x1xf32>
    %cst_17 = arith.constant 3.125000e-02 : f32
    %27 = vector.broadcast %cst_17 : f32 to vector<512x1xf32>
    %28 = arith.mulf %26, %27 : vector<512x1xf32>
    %c0_18 = arith.constant 0 : index
    %c0_19 = arith.constant 0 : index
    %29 = vector.load %arg7[%c0_18, %c0_19] : memref<512x1xf32, #tpu.memory_space<vmem>>, vector<512x1xf32>
    tpu.vector_store %arg7[%c0_18, %c0_19], %28 {strides = array<i32>} : memref<512x1xf32, #tpu.memory_space<vmem>>, vector<512x1xf32>,
    return
  }
  func.func @transform_0(%arg0: i32) -> (i32, i32) {
    %c0_i32 = arith.constant 0 : i32
    %c0_i32_0 = arith.constant 0 : i32
    return %arg0, %c0_i32 : i32, i32
  }
  func.func @transform_1(%arg0: i32) -> (i32, i32) {
    %c0_i32 = arith.constant 0 : i32
    %c0_i32_0 = arith.constant 0 : i32
    %c0_i32_1 = arith.constant 0 : i32
    return %c0_i32, %c0_i32_0 : i32, i32
  }
  func.func @transform_2(%arg0: i32) -> (i32, i32) {
    %c0_i32 = arith.constant 0 : i32
    %c0_i32_0 = arith.constant 0 : i32
    %c0_i32_1 = arith.constant 0 : i32
    return %c0_i32, %c0_i32_0 : i32, i32
  }
  func.func @transform_3(%arg0: i32) -> (i32, i32) {
    %c0_i32 = arith.constant 0 : i32
    %c0_i32_0 = arith.constant 0 : i32
    %c0_i32_1 = arith.constant 0 : i32
    return %c0_i32, %c0_i32_0 : i32, i32
  }
  func.func @transform_4(%arg0: i32) -> (i32, i32) {
    %c0_i32 = arith.constant 0 : i32
    %c0_i32_0 = arith.constant 0 : i32
    %c0_i32_1 = arith.constant 0 : i32
    return %c0_i32, %c0_i32_0 : i32, i32
  }
  func.func @transform_5(%arg0: i32) -> (i32, i32) {
    %c0_i32 = arith.constant 0 : i32
    %c0_i32_0 = arith.constant 0 : i32
    %c0_i32_1 = arith.constant 0 : i32
    return %c0_i32, %c0_i32_0 : i32, i32
  }
  func.func @transform_6(%arg0: i32) -> (i32, i32) {
    %c0_i32 = arith.constant 0 : i32
    %c0_i32_0 = arith.constant 0 : i32
    return %arg0, %c0_i32 : i32, i32
  }
}

</mosaic_0001>

<llo_original>
// kernel: tpu_custom_call.1
$region0: #{tpu_custom_call.1}
  #allocation0 [shape = 'u32[]', space=smem, size = 0x4, offset = 0x4, fixed_abs, tag = 'smem constant byte address 0x4 - core index']
  #allocation1 [shape = 'u32[144,128]{1,0:T(1,128)}', space=vmem, size = 0x12000, scoped, tag = 'internal scratch']
  %s0 = inlined_call_operand.vmem [shape: f32[1024,1], index: 0, kind: input, shape index: {}]
  %s1 = inlined_call_operand.vmem [shape: f32[128,128], index: 1, kind: input, shape index: {}]
  %s2 = inlined_call_operand.vmem [shape: f32[128,128], index: 2, kind: input, shape index: {}]
  %s3 = inlined_call_operand.vmem [shape: f32[1,128], index: 3, kind: input, shape index: {}]
  %s4 = inlined_call_operand.vmem [shape: f32[128,128], index: 4, kind: input, shape index: {}]
  %s5 = inlined_call_operand.vmem [shape: f32[1,128], index: 5, kind: input, shape index: {}]
  %s6 = inlined_call_operand.vmem [shape: f32[1024,1], index: 6, kind: output, shape index: {}]
  %s7 = sld [smem:[#allocation0]]
  $region57: #{tpu_custom_call.1} parent=0
    _
  %s9 = ssub.s32 1, %s7
  %s10 = scalar_select 0, %s9, %s7
  loop: start=0, step=1, limit=4
  $region2: #{tpu_custom_call.1} parent=0 // loop_pre_header
    _
  $region3: #{tpu_custom_call.1} parent=0 // loop_header
    %s12 = sphi 0, %s16
    %p13 = scmp.ge.s32.totalorder %s12, 4
    %s22 = sphi 0, %s24
    %s25 = sphi 0, %s22
    %s26 = sphi 0, %s25
    %s42 = sphi 0, %s26
    %s46 = sphi 0, %s46
    %s48 = sphi 0, %s46
    %s49 = sphi 0, %s48
    %s63 = sphi 0, %s49
    %s67 = sphi 0, %s67
    %s69 = sphi 0, %s67
    %s70 = sphi 0, %s69
    %s84 = sphi 0, %s70
    %s88 = sphi 0, %s88
    %s90 = sphi 0, %s88
    %s91 = sphi 0, %s90
    %s105 = sphi 0, %s91
    %s109 = sphi 0, %s109
    %s111 = sphi 0, %s109
    %s112 = sphi 0, %s111
    %s126 = sphi 0, %s112
    %s130 = sphi 0, %s130
    %s132 = sphi 0, %s130
    %s133 = sphi 0, %s132
    %s147 = sphi 0, %s133
    %s153 = sphi 0, %s155
    %s156 = sphi 0, %s153
    %s157 = sphi 0, %s156
    %s173 = sphi 0, %s157
  $region4: #{tpu_custom_call.1} parent=0 // loop_header_branch
    %15 = sbr.rel (%p13) target = $region8
  $region5: #{tpu_custom_call.1} parent=0 // loop_body
    %s17 = ssub.s32 %s12, 1
    %s18 = ssub.s32 %s12, 2
    %s19 = sadd.s32 %s12, 1
    %s20 = ssub.s32 %s12, %s19
    %p21 = scmp.eq.s32.totalorder %s20, 0
    %s23 = sadd.s32 %s22, 1
    %s24 = scalar_select %p21, %s22, %s23
    %p27 = pneg %p21
    %p28 = scmp.eq.s32.totalorder %s12, 1
    %p29 = por %p27, %p28
    %p30 = scmp.ne.s32.totalorder %s22, %s25
    %p31 = scmp.eq.s32.totalorder %s12, 0
    %p32 = por %p30, %p31
    %p33 = scmp.ne.s32.totalorder %s22, %s25
    %p34 = scmp.eq.s32.totalorder %s17, 1
    %p35 = por %p33, %p34
    %p36 = scmp.ne.s32.totalorder %s25, %s26
    %p37 = scmp.eq.s32.totalorder %s17, 0
    %p38 = por %p36, %p37
    %p39 = scmp.ne.s32.totalorder %s25, %s26
    %p40 = scmp.eq.s32.totalorder %s18, 1
    %p41 = por %p39, %p40
    %p43 = scmp.ne.s32.totalorder %s26, %s42
    %p44 = scmp.eq.s32.totalorder %s18, 0
    %p45 = por %p43, %p44
    %s47 = sadd.s32 %s46, 1
    %p50 = scmp.eq.s32.totalorder %s12, 1
    %p51 = scmp.ne.s32.totalorder %s46, %s48
    %p52 = scmp.eq.s32.totalorder %s12, 0
    %p53 = por %p51, %p52
    %p54 = scmp.ne.s32.totalorder %s46, %s48
    %p55 = scmp.eq.s32.totalorder %s17, 1
    %p56 = por %p54, %p55
    %p57 = scmp.ne.s32.totalorder %s48, %s49
    %p58 = scmp.eq.s32.totalorder %s17, 0
    %p59 = por %p57, %p58
    %p60 = scmp.ne.s32.totalorder %s48, %s49
    %p61 = scmp.eq.s32.totalorder %s18, 1
    %p62 = por %p60, %p61
    %p64 = scmp.ne.s32.totalorder %s49, %s63
    %p65 = scmp.eq.s32.totalorder %s18, 0
    %p66 = por %p64, %p65
    %s68 = sadd.s32 %s67, 1
    %p71 = scmp.eq.s32.totalorder %s12, 1
    %p72 = scmp.ne.s32.totalorder %s67, %s69
    %p73 = scmp.eq.s32.totalorder %s12, 0
    %p74 = por %p72, %p73
    %p75 = scmp.ne.s32.totalorder %s67, %s69
    %p76 = scmp.eq.s32.totalorder %s17, 1
    %p77 = por %p75, %p76
    %p78 = scmp.ne.s32.totalorder %s69, %s70
    %p79 = scmp.eq.s32.totalorder %s17, 0
    %p80 = por %p78, %p79
    %p81 = scmp.ne.s32.totalorder %s69, %s70
    %p82 = scmp.eq.s32.totalorder %s18, 1
    %p83 = por %p81, %p82
    %p85 = scmp.ne.s32.totalorder %s70, %s84
    %p86 = scmp.eq.s32.totalorder %s18, 0
    %p87 = por %p85, %p86
    %s89 = sadd.s32 %s88, 1
    %p92 = scmp.eq.s32.totalorder %s12, 1
    %p93 = scmp.ne.s32.totalorder %s88, %s90
    %p94 = scmp.eq.s32.totalorder %s12, 0
    %p95 = por %p93, %p94
    %p96 = scmp.ne.s32.totalorder %s88, %s90
    %p97 = scmp.eq.s32.totalorder %s17, 1
    %p98 = por %p96, %p97
    %p99 = scmp.ne.s32.totalorder %s90, %s91
    %p100 = scmp.eq.s32.totalorder %s17, 0
    %p101 = por %p99, %p100
    %p102 = scmp.ne.s32.totalorder %s90, %s91
    %p103 = scmp.eq.s32.totalorder %s18, 1
    %p104 = por %p102, %p103
    %p106 = scmp.ne.s32.totalorder %s91, %s105
    %p107 = scmp.eq.s32.totalorder %s18, 0
    %p108 = por %p106, %p107
    %s110 = sadd.s32 %s109, 1
    %p113 = scmp.eq.s32.totalorder %s12, 1
    %p114 = scmp.ne.s32.totalorder %s109, %s111
    %p115 = scmp.eq.s32.totalorder %s12, 0
    %p116 = por %p114, %p115
    %p117 = scmp.ne.s32.totalorder %s109, %s111
    %p118 = scmp.eq.s32.totalorder %s17, 1
    %p119 = por %p117, %p118
    %p120 = scmp.ne.s32.totalorder %s111, %s112
    %p121 = scmp.eq.s32.totalorder %s17, 0
    %p122 = por %p120, %p121
    %p123 = scmp.ne.s32.totalorder %s111, %s112
    %p124 = scmp.eq.s32.totalorder %s18, 1
    %p125 = por %p123, %p124
    %p127 = scmp.ne.s32.totalorder %s112, %s126
    %p128 = scmp.eq.s32.totalorder %s18, 0
    %p129 = por %p127, %p128
    %s131 = sadd.s32 %s130, 1
    %p134 = scmp.eq.s32.totalorder %s12, 1
    %p135 = scmp.ne.s32.totalorder %s130, %s132
    %p136 = scmp.eq.s32.totalorder %s12, 0
    %p137 = por %p135, %p136
    %p138 = scmp.ne.s32.totalorder %s130, %s132
    %p139 = scmp.eq.s32.totalorder %s17, 1
    %p140 = por %p138, %p139
    %p141 = scmp.ne.s32.totalorder %s132, %s133
    %p142 = scmp.eq.s32.totalorder %s17, 0
    %p143 = por %p141, %p142
    %p144 = scmp.ne.s32.totalorder %s132, %s133
    %p145 = scmp.eq.s32.totalorder %s18, 1
    %p146 = por %p144, %p145
    %p148 = scmp.ne.s32.totalorder %s133, %s147
    %p149 = scmp.eq.s32.totalorder %s18, 0
    %p150 = por %p148, %p149
    %s151 = ssub.s32 %s12, %s19
    %p152 = scmp.eq.s32.totalorder %s151, 0
    %s154 = sadd.s32 %s153, 1
    %s155 = scalar_select %p152, %s153, %s154
    %p158 = pneg %p152
    %p159 = scmp.eq.s32.totalorder %s12, 1
    %p160 = por %p158, %p159
    %p161 = scmp.ne.s32.totalorder %s153, %s156
    %p162 = scmp.eq.s32.totalorder %s12, 0
    %p163 = por %p161, %p162
    %p164 = scmp.ne.s32.totalorder %s153, %s156
    %p165 = scmp.eq.s32.totalorder %s17, 1
    %p166 = por %p164, %p165
    %p167 = scmp.ne.s32.totalorder %s156, %s157
    %p168 = scmp.eq.s32.totalorder %s17, 0
    %p169 = por %p167, %p168
    %p170 = scmp.ne.s32.totalorder %s156, %s157
    %p171 = scmp.eq.s32.totalorder %s18, 1
    %p172 = por %p170, %p171
    %p174 = scmp.ne.s32.totalorder %s157, %s173
    %p175 = scmp.eq.s32.totalorder %s18, 0
    %p176 = por %p174, %p175
    %p177 = scmp.le.s32.totalorder 1, %s12
    %p178 = scmp.lt.s32.totalorder %s12, 3
    %p179 = pnand %p177, %p178
    %p180 = pneg %p179
    // Predicated region
    $region9: #{tpu_custom_call.1} parent=5 // pred_check
      _
    $region10: #{tpu_custom_call.1} parent=5 // pred_check_branch
      %182 = sbr.rel (%p179) target = $region12
    $region11: #{tpu_custom_call.1} parent=5 // pred_region
      %s183 = ssub.s32 %s12, 1
      // Predicated region
      $region13: #{tpu_custom_call.1} parent=11 // pred_check
        %p184 = pneg %p59
      $region14: #{tpu_custom_call.1} parent=11 // pred_check_branch
        %186 = sbr.rel (%p184) target = $region16
      $region15: #{tpu_custom_call.1} parent=11 // pred_region
        _
      $region16: #{tpu_custom_call.1} parent=11 // pred_fallthru
        _
      // Predicated region
      $region17: #{tpu_custom_call.1} parent=11 // pred_check
        %p187 = pneg %p80
      $region18: #{tpu_custom_call.1} parent=11 // pred_check_branch
        %189 = sbr.rel (%p187) target = $region20
      $region19: #{tpu_custom_call.1} parent=11 // pred_region
        _
      $region20: #{tpu_custom_call.1} parent=11 // pred_fallthru
        _
      // Predicated region
      $region21: #{tpu_custom_call.1} parent=11 // pred_check
        %p190 = pneg %p101
      $region22: #{tpu_custom_call.1} parent=11 // pred_check_branch
        %192 = sbr.rel (%p190) target = $region24
      $region23: #{tpu_custom_call.1} parent=11 // pred_region
        _
      $region24: #{tpu_custom_call.1} parent=11 // pred_fallthru
        _
      // Predicated region
      $region25: #{tpu_custom_call.1} parent=11 // pred_check
        %p193 = pneg %p122
      $region26: #{tpu_custom_call.1} parent=11 // pred_check_branch
        %195 = sbr.rel (%p193) target = $region28
      $region27: #{tpu_custom_call.1} parent=11 // pred_region
        _
      $region28: #{tpu_custom_call.1} parent=11 // pred_fallthru
        _
      // Predicated region
      $region29: #{tpu_custom_call.1} parent=11 // pred_check
        %p196 = pneg %p143
      $region30: #{tpu_custom_call.1} parent=11 // pred_check_branch
        %198 = sbr.rel (%p196) target = $region32
      $region31: #{tpu_custom_call.1} parent=11 // pred_region
        _
      $region32: #{tpu_custom_call.1} parent=11 // pred_fallthru
        _
    $region12: #{tpu_custom_call.1} parent=5 // pred_fallthru
      _
    %p199 = scmp.lt.s32.totalorder %s12, 2
    // Predicated region
    $region33: #{tpu_custom_call.1} parent=5 // pred_check
      %p200 = pneg %p199
    $region34: #{tpu_custom_call.1} parent=5 // pred_check_branch
      %202 = sbr.rel (%p200) target = $region36
    $region35: #{tpu_custom_call.1} parent=5 // pred_region
      // Predicated region
      $region37: #{tpu_custom_call.1} parent=35 // pred_check
        %p203 = pneg %p32
      $region38: #{tpu_custom_call.1} parent=35 // pred_check_branch
        %205 = sbr.rel (%p203) target = $region40
      $region39: #{tpu_custom_call.1} parent=35 // pred_region
        %s206 = smul.u32 64, %s12
        %p207 = scmp.lt.s32.totalorder %s206, 127
        %s208 = scalar_select %p207, %s206, 127
        %s209 = smul.addr %s208, 8
        %s210 = scalar_lea.vmem %s0, %s209
        %s211 = smul.u32 64, %s12
      $region40: #{tpu_custom_call.1} parent=35 // pred_fallthru
        _
    $region36: #{tpu_custom_call.1} parent=5 // pred_fallthru
      _
    %p212 = scmp.le.s32.totalorder 1, %s12
    %p213 = scmp.lt.s32.totalorder %s12, 3
    %p214 = pnand %p212, %p213
    %p215 = pneg %p214
    // Predicated region
    $region41: #{tpu_custom_call.1} parent=5 // pred_check
      _
    $region42: #{tpu_custom_call.1} parent=5 // pred_check_branch
      %217 = sbr.rel (%p214) target = $region44
    $region43: #{tpu_custom_call.1} parent=5 // pred_region
      %s218 = ssub.s32 %s12, 1
      %s219 = smul.u32 64, %s17
      %p220 = scmp.lt.s32.totalorder %s219, 127
      %s221 = scalar_select %p220, %s219, 127
      %s222 = smul.addr %s221, 8
      %s223 = scalar_lea.vmem %s0, %s222
      %p224 = pneg %p38
      %p225 = pneg %p35
      %p226 = pneg %p59
      %p227 = pneg %p56
      %p228 = pneg %p80
      %p229 = pneg %p77
      %p230 = pneg %p101
      %p231 = pneg %p98
      %p232 = pneg %p122
      %p233 = pneg %p119
      %p234 = pneg %p143
      %p235 = pneg %p140
      %p236 = pneg %p169
      %p237 = pneg %p166
      %s238 = smul.u32 64, %s17
      %p239 = scmp.lt.s32.totalorder %s238, 127
      %s240 = scalar_select %p239, %s238, 127
      %s241 = smul.addr %s240, 8
      %s242 = scalar_lea.vmem %s6, %s241
      %s243 = smul.u32 64, %s17
      %p244 = scmp.lt.s32.totalorder %s243, 127
      %s245 = scalar_select %p244, %s243, 127
      %s246 = smul.addr %s245, 8
      %s247 = scalar_lea.vmem %s0, %s246
      %s248 = smul.u32 64, %s17
      %s249 = smul.u32 64, %s17
      %p250 = scmp.lt.s32.totalorder %s249, 127
      %s251 = scalar_select %p250, %s249, 127
      %s252 = smul.addr %s251, 8
      %s253 = scalar_lea.vmem %s6, %s252
      %s254 = smul.u32 64, %s17
      %v255 = vld [vmem:[%s1] sm:$0xff]
      %v256 = vld [vmem:[%s1 + $0x8] sm:$0xff]
      %v257 = vld [vmem:[%s1 + $0x10] sm:$0xff]
      %v258 = vld [vmem:[%s1 + $0x18] sm:$0xff]
      %v259 = vld [vmem:[%s1 + $0x20] sm:$0xff]
      %v260 = vld [vmem:[%s1 + $0x28] sm:$0xff]
      %v261 = vld [vmem:[%s1 + $0x30] sm:$0xff]
      %v262 = vld [vmem:[%s1 + $0x38] sm:$0xff]
      %v263 = vld [vmem:[%s1 + $0x40] sm:$0xff]
      %v264 = vld [vmem:[%s1 + $0x48] sm:$0xff]
      %v265 = vld [vmem:[%s1 + $0x50] sm:$0xff]
      %v266 = vld [vmem:[%s1 + $0x58] sm:$0xff]
      %v267 = vld [vmem:[%s1 + $0x60] sm:$0xff]
      %v268 = vld [vmem:[%s1 + $0x68] sm:$0xff]
      %v269 = vld [vmem:[%s1 + $0x70] sm:$0xff]
      %v270 = vld [vmem:[%s1 + $0x78] sm:$0xff]
      %v271 = vld [vmem:[%s247] sm:$0xff]
      %v272 = vld [vmem:[%s247 + $0x8] sm:$0xff]
      %v273 = vld [vmem:[%s247 + $0x10] sm:$0xff]
      %v274 = vld [vmem:[%s247 + $0x18] sm:$0xff]
      %v275 = vld [vmem:[%s247 + $0x20] sm:$0xff]
      %v276 = vld [vmem:[%s247 + $0x28] sm:$0xff]
      %v277 = vld [vmem:[%s247 + $0x30] sm:$0xff]
      %v278 = vld [vmem:[%s247 + $0x38] sm:$0xff]
      %v279 = vld [vmem:[%s247 + $0x40] sm:$0xff]
      %v280 = vld [vmem:[%s247 + $0x48] sm:$0xff]
      %v281 = vld [vmem:[%s247 + $0x50] sm:$0xff]
      %v282 = vld [vmem:[%s247 + $0x58] sm:$0xff]
      %v283 = vld [vmem:[%s247 + $0x60] sm:$0xff]
      %v284 = vld [vmem:[%s247 + $0x68] sm:$0xff]
      %v285 = vld [vmem:[%s247 + $0x70] sm:$0xff]
      %v286 = vld [vmem:[%s247 + $0x78] sm:$0xff]
      %v287 = vld [vmem:[%s247 + $0x80] sm:$0xff]
      %v288 = vld [vmem:[%s247 + $0x88] sm:$0xff]
      %v289 = vld [vmem:[%s247 + $0x90] sm:$0xff]
      %v290 = vld [vmem:[%s247 + $0x98] sm:$0xff]
      %v291 = vld [vmem:[%s247 + $0xa0] sm:$0xff]
      %v292 = vld [vmem:[%s247 + $0xa8] sm:$0xff]
      %v293 = vld [vmem:[%s247 + $0xb0] sm:$0xff]
      %v294 = vld [vmem:[%s247 + $0xb8] sm:$0xff]
      %v295 = vld [vmem:[%s247 + $0xc0] sm:$0xff]
      %v296 = vld [vmem:[%s247 + $0xc8] sm:$0xff]
      %v297 = vld [vmem:[%s247 + $0xd0] sm:$0xff]
      %v298 = vld [vmem:[%s247 + $0xd8] sm:$0xff]
      %v299 = vld [vmem:[%s247 + $0xe0] sm:$0xff]
      %v300 = vld [vmem:[%s247 + $0xe8] sm:$0xff]
      %v301 = vld [vmem:[%s247 + $0xf0] sm:$0xff]
      %v302 = vld [vmem:[%s247 + $0xf8] sm:$0xff]
      %v303 = vld [vmem:[%s247 + $0x100] sm:$0xff]
      %v304 = vld [vmem:[%s247 + $0x108] sm:$0xff]
      %v305 = vld [vmem:[%s247 + $0x110] sm:$0xff]
      %v306 = vld [vmem:[%s247 + $0x118] sm:$0xff]
      %v307 = vld [vmem:[%s247 + $0x120] sm:$0xff]
      %v308 = vld [vmem:[%s247 + $0x128] sm:$0xff]
      %v309 = vld [vmem:[%s247 + $0x130] sm:$0xff]
      %v310 = vld [vmem:[%s247 + $0x138] sm:$0xff]
      %v311 = vld [vmem:[%s247 + $0x140] sm:$0xff]
      %v312 = vld [vmem:[%s247 + $0x148] sm:$0xff]
      %v313 = vld [vmem:[%s247 + $0x150] sm:$0xff]
      %v314 = vld [vmem:[%s247 + $0x158] sm:$0xff]
      %v315 = vld [vmem:[%s247 + $0x160] sm:$0xff]
      %v316 = vld [vmem:[%s247 + $0x168] sm:$0xff]
      %v317 = vld [vmem:[%s247 + $0x170] sm:$0xff]
      %v318 = vld [vmem:[%s247 + $0x178] sm:$0xff]
      %v319 = vld [vmem:[%s247 + $0x180] sm:$0xff]
      %v320 = vld [vmem:[%s247 + $0x188] sm:$0xff]
      %v321 = vld [vmem:[%s247 + $0x190] sm:$0xff]
      %v322 = vld [vmem:[%s247 + $0x198] sm:$0xff]
      %v323 = vld [vmem:[%s247 + $0x1a0] sm:$0xff]
      %v324 = vld [vmem:[%s247 + $0x1a8] sm:$0xff]
      %v325 = vld [vmem:[%s247 + $0x1b0] sm:$0xff]
      %v326 = vld [vmem:[%s247 + $0x1b8] sm:$0xff]
      %v327 = vld [vmem:[%s247 + $0x1c0] sm:$0xff]
      %v328 = vld [vmem:[%s247 + $0x1c8] sm:$0xff]
      %v329 = vld [vmem:[%s247 + $0x1d0] sm:$0xff]
      %v330 = vld [vmem:[%s247 + $0x1d8] sm:$0xff]
      %v331 = vld [vmem:[%s247 + $0x1e0] sm:$0xff]
      %v332 = vld [vmem:[%s247 + $0x1e8] sm:$0xff]
      %v333 = vld [vmem:[%s247 + $0x1f0] sm:$0xff]
      %v334 = vld [vmem:[%s247 + $0x1f8] sm:$0xff]
      %336 = vset.pattern.permute.xlu0 0
      %337 = vperm.xlu0 %336, %v271
      %v338 = vpop.permute.xlu0 %337
      %341 = vset.pattern.permute.xlu0 0
      %342 = vperm.xlu0 %341, %v272
      %v343 = vpop.permute.xlu0 %342
      %346 = vset.pattern.permute.xlu0 0
      %347 = vperm.xlu0 %346, %v273
      %v348 = vpop.permute.xlu0 %347
      %351 = vset.pattern.permute.xlu0 0
      %352 = vperm.xlu0 %351, %v274
      %v353 = vpop.permute.xlu0 %352
      %356 = vset.pattern.permute.xlu0 0
      %357 = vperm.xlu0 %356, %v275
      %v358 = vpop.permute.xlu0 %357
      %361 = vset.pattern.permute.xlu0 0
      %362 = vperm.xlu0 %361, %v276
      %v363 = vpop.permute.xlu0 %362
      %366 = vset.pattern.permute.xlu0 0
      %367 = vperm.xlu0 %366, %v277
      %v368 = vpop.permute.xlu0 %367
      %371 = vset.pattern.permute.xlu0 0
      %372 = vperm.xlu0 %371, %v278
      %v373 = vpop.permute.xlu0 %372
      %376 = vset.pattern.permute.xlu0 0
      %377 = vperm.xlu0 %376, %v279
      %v378 = vpop.permute.xlu0 %377
      %381 = vset.pattern.permute.xlu0 0
      %382 = vperm.xlu0 %381, %v280
      %v383 = vpop.permute.xlu0 %382
      %386 = vset.pattern.permute.xlu0 0
      %387 = vperm.xlu0 %386, %v281
      %v388 = vpop.permute.xlu0 %387
      %391 = vset.pattern.permute.xlu0 0
      %392 = vperm.xlu0 %391, %v282
      %v393 = vpop.permute.xlu0 %392
      %396 = vset.pattern.permute.xlu0 0
      %397 = vperm.xlu0 %396, %v283
      %v398 = vpop.permute.xlu0 %397
      %401 = vset.pattern.permute.xlu0 0
      %402 = vperm.xlu0 %401, %v284
      %v403 = vpop.permute.xlu0 %402
      %406 = vset.pattern.permute.xlu0 0
      %407 = vperm.xlu0 %406, %v285
      %v408 = vpop.permute.xlu0 %407
      %411 = vset.pattern.permute.xlu0 0
      %412 = vperm.xlu0 %411, %v286
      %v413 = vpop.permute.xlu0 %412
      %416 = vset.pattern.permute.xlu0 0
      %417 = vperm.xlu0 %416, %v287
      %v418 = vpop.permute.xlu0 %417
      %421 = vset.pattern.permute.xlu0 0
      %422 = vperm.xlu0 %421, %v288
      %v423 = vpop.permute.xlu0 %422
      %426 = vset.pattern.permute.xlu0 0
      %427 = vperm.xlu0 %426, %v289
      %v428 = vpop.permute.xlu0 %427
      %431 = vset.pattern.permute.xlu0 0
      %432 = vperm.xlu0 %431, %v290
      %v433 = vpop.permute.xlu0 %432
      %436 = vset.pattern.permute.xlu0 0
      %437 = vperm.xlu0 %436, %v291
      %v438 = vpop.permute.xlu0 %437
      %441 = vset.pattern.permute.xlu0 0
      %442 = vperm.xlu0 %441, %v292
      %v443 = vpop.permute.xlu0 %442
      %446 = vset.pattern.permute.xlu0 0
      %447 = vperm.xlu0 %446, %v293
      %v448 = vpop.permute.xlu0 %447
      %451 = vset.pattern.permute.xlu0 0
      %452 = vperm.xlu0 %451, %v294
      %v453 = vpop.permute.xlu0 %452
      %456 = vset.pattern.permute.xlu0 0
      %457 = vperm.xlu0 %456, %v295
      %v458 = vpop.permute.xlu0 %457
      %461 = vset.pattern.permute.xlu0 0
      %462 = vperm.xlu0 %461, %v296
      %v463 = vpop.permute.xlu0 %462
      %466 = vset.pattern.permute.xlu0 0
      %467 = vperm.xlu0 %466, %v297
      %v468 = vpop.permute.xlu0 %467
      %471 = vset.pattern.permute.xlu0 0
      %472 = vperm.xlu0 %471, %v298
      %v473 = vpop.permute.xlu0 %472
      %476 = vset.pattern.permute.xlu0 0
      %477 = vperm.xlu0 %476, %v299
      %v478 = vpop.permute.xlu0 %477
      %481 = vset.pattern.permute.xlu0 0
      %482 = vperm.xlu0 %481, %v300
      %v483 = vpop.permute.xlu0 %482
      %486 = vset.pattern.permute.xlu0 0
      %487 = vperm.xlu0 %486, %v301
      %v488 = vpop.permute.xlu0 %487
      %491 = vset.pattern.permute.xlu0 0
      %492 = vperm.xlu0 %491, %v302
      %v493 = vpop.permute.xlu0 %492
      %496 = vset.pattern.permute.xlu0 0
      %497 = vperm.xlu0 %496, %v303
      %v498 = vpop.permute.xlu0 %497
      %501 = vset.pattern.permute.xlu0 0
      %502 = vperm.xlu0 %501, %v304
      %v503 = vpop.permute.xlu0 %502
      %506 = vset.pattern.permute.xlu0 0
      %507 = vperm.xlu0 %506, %v305
      %v508 = vpop.permute.xlu0 %507
      %511 = vset.pattern.permute.xlu0 0
      %512 = vperm.xlu0 %511, %v306
      %v513 = vpop.permute.xlu0 %512
      %516 = vset.pattern.permute.xlu0 0
      %517 = vperm.xlu0 %516, %v307
      %v518 = vpop.permute.xlu0 %517
      %521 = vset.pattern.permute.xlu0 0
      %522 = vperm.xlu0 %521, %v308
      %v523 = vpop.permute.xlu0 %522
      %526 = vset.pattern.permute.xlu0 0
      %527 = vperm.xlu0 %526, %v309
      %v528 = vpop.permute.xlu0 %527
      %531 = vset.pattern.permute.xlu0 0
      %532 = vperm.xlu0 %531, %v310
      %v533 = vpop.permute.xlu0 %532
      %536 = vset.pattern.permute.xlu0 0
      %537 = vperm.xlu0 %536, %v311
      %v538 = vpop.permute.xlu0 %537
      %541 = vset.pattern.permute.xlu0 0
      %542 = vperm.xlu0 %541, %v312
      %v543 = vpop.permute.xlu0 %542
      %546 = vset.pattern.permute.xlu0 0
      %547 = vperm.xlu0 %546, %v313
      %v548 = vpop.permute.xlu0 %547
      %551 = vset.pattern.permute.xlu0 0
      %552 = vperm.xlu0 %551, %v314
      %v553 = vpop.permute.xlu0 %552
      %556 = vset.pattern.permute.xlu0 0
      %557 = vperm.xlu0 %556, %v315
      %v558 = vpop.permute.xlu0 %557
      %561 = vset.pattern.permute.xlu0 0
      %562 = vperm.xlu0 %561, %v316
      %v563 = vpop.permute.xlu0 %562
      %566 = vset.pattern.permute.xlu0 0
      %567 = vperm.xlu0 %566, %v317
      %v568 = vpop.permute.xlu0 %567
      %571 = vset.pattern.permute.xlu0 0
      %572 = vperm.xlu0 %571, %v318
      %v573 = vpop.permute.xlu0 %572
      %576 = vset.pattern.permute.xlu0 0
      %577 = vperm.xlu0 %576, %v319
      %v578 = vpop.permute.xlu0 %577
      %581 = vset.pattern.permute.xlu0 0
      %582 = vperm.xlu0 %581, %v320
      %v583 = vpop.permute.xlu0 %582
      %586 = vset.pattern.permute.xlu0 0
      %587 = vperm.xlu0 %586, %v321
      %v588 = vpop.permute.xlu0 %587
      %591 = vset.pattern.permute.xlu0 0
      %592 = vperm.xlu0 %591, %v322
      %v593 = vpop.permute.xlu0 %592
      %596 = vset.pattern.permute.xlu0 0
      %597 = vperm.xlu0 %596, %v323
      %v598 = vpop.permute.xlu0 %597
      %601 = vset.pattern.permute.xlu0 0
      %602 = vperm.xlu0 %601, %v324
      %v603 = vpop.permute.xlu0 %602
      %606 = vset.pattern.permute.xlu0 0
      %607 = vperm.xlu0 %606, %v325
      %v608 = vpop.permute.xlu0 %607
      %611 = vset.pattern.permute.xlu0 0
      %612 = vperm.xlu0 %611, %v326
      %v613 = vpop.permute.xlu0 %612
      %616 = vset.pattern.permute.xlu0 0
      %617 = vperm.xlu0 %616, %v327
      %v618 = vpop.permute.xlu0 %617
      %621 = vset.pattern.permute.xlu0 0
      %622 = vperm.xlu0 %621, %v328
      %v623 = vpop.permute.xlu0 %622
      %626 = vset.pattern.permute.xlu0 0
      %627 = vperm.xlu0 %626, %v329
      %v628 = vpop.permute.xlu0 %627
      %631 = vset.pattern.permute.xlu0 0
      %632 = vperm.xlu0 %631, %v330
      %v633 = vpop.permute.xlu0 %632
      %636 = vset.pattern.permute.xlu0 0
      %637 = vperm.xlu0 %636, %v331
      %v638 = vpop.permute.xlu0 %637
      %641 = vset.pattern.permute.xlu0 0
      %642 = vperm.xlu0 %641, %v332
      %v643 = vpop.permute.xlu0 %642
      %646 = vset.pattern.permute.xlu0 0
      %647 = vperm.xlu0 %646, %v333
      %v648 = vpop.permute.xlu0 %647
      %651 = vset.pattern.permute.xlu0 0
      %652 = vperm.xlu0 %651, %v334
      %v653 = vpop.permute.xlu0 %652
      %v655 = vmul.f32 %v338, %v255
      %v656 = vmul.f32 %v343, %v256
      %v657 = vmul.f32 %v348, %v257
      %v658 = vmul.f32 %v353, %v258
      %v659 = vmul.f32 %v358, %v259
      %v660 = vmul.f32 %v363, %v260
      %v661 = vmul.f32 %v368, %v261
      %v662 = vmul.f32 %v373, %v262
      %v663 = vmul.f32 %v378, %v263
      %v664 = vmul.f32 %v383, %v264
      %v665 = vmul.f32 %v388, %v265
      %v666 = vmul.f32 %v393, %v266
      %v667 = vmul.f32 %v398, %v267
      %v668 = vmul.f32 %v403, %v268
      %v669 = vmul.f32 %v408, %v269
      %v670 = vmul.f32 %v413, %v270
      %v671 = vmul.f32 %v418, %v255
      %v672 = vmul.f32 %v423, %v256
      %v673 = vmul.f32 %v428, %v257
      %v674 = vmul.f32 %v433, %v258
      %v675 = vmul.f32 %v438, %v259
      %v676 = vmul.f32 %v443, %v260
      %v677 = vmul.f32 %v448, %v261
      %v678 = vmul.f32 %v453, %v262
      %v679 = vmul.f32 %v458, %v263
      %v680 = vmul.f32 %v463, %v264
      %v681 = vmul.f32 %v468, %v265
      %v682 = vmul.f32 %v473, %v266
      %v683 = vmul.f32 %v478, %v267
      %v684 = vmul.f32 %v483, %v268
      %v685 = vmul.f32 %v488, %v269
      %v686 = vmul.f32 %v493, %v270
      %v687 = vmul.f32 %v498, %v255
      %v688 = vmul.f32 %v503, %v256
      %v689 = vmul.f32 %v508, %v257
      %v690 = vmul.f32 %v513, %v258
      %v691 = vmul.f32 %v518, %v259
      %v692 = vmul.f32 %v523, %v260
      %v693 = vmul.f32 %v528, %v261
      %v694 = vmul.f32 %v533, %v262
      %v695 = vmul.f32 %v538, %v263
      %v696 = vmul.f32 %v543, %v264
      %v697 = vmul.f32 %v548, %v265
      %v698 = vmul.f32 %v553, %v266
      %v699 = vmul.f32 %v558, %v267
      %v700 = vmul.f32 %v563, %v268
      %v701 = vmul.f32 %v568, %v269
      %v702 = vmul.f32 %v573, %v270
      %v703 = vmul.f32 %v578, %v255
      %v704 = vmul.f32 %v583, %v256
      %v705 = vmul.f32 %v588, %v257
      %v706 = vmul.f32 %v593, %v258
      %v707 = vmul.f32 %v598, %v259
      %v708 = vmul.f32 %v603, %v260
      %v709 = vmul.f32 %v608, %v261
      %v710 = vmul.f32 %v613, %v262
      %v711 = vmul.f32 %v618, %v263
      %v712 = vmul.f32 %v623, %v264
      %v713 = vmul.f32 %v628, %v265
      %v714 = vmul.f32 %v633, %v266
      %v715 = vmul.f32 %v638, %v267
      %v716 = vmul.f32 %v643, %v268
      %v717 = vmul.f32 %v648, %v269
      %v718 = vmul.f32 %v653, %v270
      %v719 = vld [vmem:[%s2] sm:$0xff]
      %v720 = vld [vmem:[%s2 + $0x8] sm:$0xff]
      %v721 = vld [vmem:[%s2 + $0x10] sm:$0xff]
      %v722 = vld [vmem:[%s2 + $0x18] sm:$0xff]
      %v723 = vld [vmem:[%s2 + $0x20] sm:$0xff]
      %v724 = vld [vmem:[%s2 + $0x28] sm:$0xff]
      %v725 = vld [vmem:[%s2 + $0x30] sm:$0xff]
      %v726 = vld [vmem:[%s2 + $0x38] sm:$0xff]
      %v727 = vld [vmem:[%s2 + $0x40] sm:$0xff]
      %v728 = vld [vmem:[%s2 + $0x48] sm:$0xff]
      %v729 = vld [vmem:[%s2 + $0x50] sm:$0xff]
      %v730 = vld [vmem:[%s2 + $0x58] sm:$0xff]
      %v731 = vld [vmem:[%s2 + $0x60] sm:$0xff]
      %v732 = vld [vmem:[%s2 + $0x68] sm:$0xff]
      %v733 = vld [vmem:[%s2 + $0x70] sm:$0xff]
      %v734 = vld [vmem:[%s2 + $0x78] sm:$0xff]
      %v735 = vld [vmem:[%s3] sm:$0x1]
      %v737 = vlaneseq
      %v738 = vshrl.u32 %v737, 7
      %v739 = vsub.s32 0, %v738
      %v740 = vrot.slane %v735, %v739
      %742 = vmatprep.subr.mxu0 0.0
      %743 = vmatpush1.msra.mxu0 %v719
      %744 = vmatprep.subr.mxu0 0.0
      %745 = vmatpush1.msra.mxu0 %v720
      %746 = vmatprep.subr.mxu0 0.0
      %747 = vmatpush1.msra.mxu0 %v721
      %748 = vmatprep.subr.mxu0 0.0
      %749 = vmatpush1.msra.mxu0 %v722
      %750 = vmatprep.subr.mxu0 0.0
      %751 = vmatpush1.msra.mxu0 %v723
      %752 = vmatprep.subr.mxu0 0.0
      %753 = vmatpush1.msra.mxu0 %v724
      %754 = vmatprep.subr.mxu0 0.0
      %755 = vmatpush1.msra.mxu0 %v725
      %756 = vmatprep.subr.mxu0 0.0
      %757 = vmatpush1.msra.mxu0 %v726
      %758 = vmatprep.subr.mxu0 0.0
      %759 = vmatpush1.msra.mxu0 %v727
      %760 = vmatprep.subr.mxu0 0.0
      %761 = vmatpush1.msra.mxu0 %v728
      %762 = vmatprep.subr.mxu0 0.0
      %763 = vmatpush1.msra.mxu0 %v729
      %764 = vmatprep.subr.mxu0 0.0
      %765 = vmatpush1.msra.mxu0 %v730
      %766 = vmatprep.subr.mxu0 0.0
      %767 = vmatpush1.msra.mxu0 %v731
      %768 = vmatprep.subr.mxu0 0.0
      %769 = vmatpush1.msra.mxu0 %v732
      %770 = vmatprep.subr.mxu0 0.0
      %771 = vmatpush1.msra.mxu0 %v733
      %772 = vmatprep.subr.mxu0 0.0
      %773 = vmatpush1.msra.mxu0 %v734
      %774 = vmatprep.subr.mxu0 0.0
      %775 = vmatpush1.msra.mxu0 0.0
      %776 = vmatprep.subr.mxu0 0.0
      %777 = vmatpush1.msra.mxu0 0.0
      %778 = vmatprep.subr.mxu0 0.0
      %779 = vmatpush1.msra.mxu0 0.0
      %780 = vmatprep.subr.mxu0 0.0
      %781 = vmatpush1.msra.mxu0 0.0
      %782 = vmatprep.subr.mxu0 0.0
      %783 = vmatpush1.msra.mxu0 0.0
      %784 = vmatprep.subr.mxu0 0.0
      %785 = vmatpush1.msra.mxu0 0.0
      %786 = vmatprep.subr.mxu0 0.0
      %787 = vmatpush1.msra.mxu0 0.0
      %788 = vmatprep.subr.mxu0 0.0
      %789 = vmatpush1.msra.mxu0 0.0
      %790 = vmatprep.subr.mxu0 0.0
      %791 = vmatpush1.msra.mxu0 0.0
      %792 = vmatprep.subr.mxu0 0.0
      %793 = vmatpush1.msra.mxu0 0.0
      %794 = vmatprep.subr.mxu0 0.0
      %795 = vmatpush1.msra.mxu0 0.0
      %796 = vmatprep.subr.mxu0 0.0
      %797 = vmatpush1.msra.mxu0 0.0
      %798 = vmatprep.subr.mxu0 0.0
      %799 = vmatpush1.msra.mxu0 0.0
      %800 = vmatprep.subr.mxu0 0.0
      %801 = vmatpush1.msra.mxu0 0.0
      %802 = vmatprep.subr.mxu0 0.0
      %803 = vmatpush1.msra.mxu0 0.0
      %804 = vmatprep.subr.mxu0 0.0
      %805 = vmatpush1.msra.mxu0 0.0
      %806 = vmatprep.mubr.f32.mxu0 0.0
      %807 = vmatmul.mubr.f32.gmra.mrb[0].mxu0 %v655
      %v808 = vpop.f32.mrb[0].mxu0
      %v809 = vadd.f32 %v740, %v808
      %v810 = vpop.f32.mrb[0].mxu0
      %811 = vmatprep.mubr.f32.mxu0 0.0
      %812 = vmatmul.mubr.f32.gmra.mrb[0].mxu0 %v656
      %v813 = vpop.f32.mrb[0].mxu0
      %v814 = vadd.f32 %v740, %v813
      %v815 = vpop.f32.mrb[0].mxu0
      %816 = vmatprep.mubr.f32.mxu0 0.0
      %817 = vmatmul.mubr.f32.gmra.mrb[0].mxu0 %v657
      %v818 = vpop.f32.mrb[0].mxu0
      %v819 = vadd.f32 %v740, %v818
      %v820 = vpop.f32.mrb[0].mxu0
      %821 = vmatprep.mubr.f32.mxu0 0.0
      %822 = vmatmul.mubr.f32.gmra.mrb[0].mxu0 %v658
      %v823 = vpop.f32.mrb[0].mxu0
      %v824 = vadd.f32 %v740, %v823
      %v825 = vpop.f32.mrb[0].mxu0
      %826 = vmatprep.mubr.f32.mxu0 0.0
      %827 = vmatmul.mubr.f32.gmra.mrb[0].mxu0 %v659
      %v828 = vpop.f32.mrb[0].mxu0
      %v829 = vadd.f32 %v740, %v828
      %v830 = vpop.f32.mrb[0].mxu0
      %831 = vmatprep.mubr.f32.mxu0 0.0
      %832 = vmatmul.mubr.f32.gmra.mrb[0].mxu0 %v660
      %v833 = vpop.f32.mrb[0].mxu0
      %v834 = vadd.f32 %v740, %v833
      %v835 = vpop.f32.mrb[0].mxu0
      %836 = vmatprep.mubr.f32.mxu0 0.0
      %837 = vmatmul.mubr.f32.gmra.mrb[0].mxu0 %v661
      %v838 = vpop.f32.mrb[0].mxu0
      %v839 = vadd.f32 %v740, %v838
      %v840 = vpop.f32.mrb[0].mxu0
      %841 = vmatprep.mubr.f32.mxu0 0.0
      %842 = vmatmul.mubr.f32.gmra.mrb[0].mxu0 %v662
      %v843 = vpop.f32.mrb[0].mxu0
      %v844 = vadd.f32 %v740, %v843
      %v845 = vpop.f32.mrb[0].mxu0
      %846 = vmatprep.mubr.f32.mxu0 0.0
      %847 = vmatmul.mubr.f32.gmra.mrb[0].mxu0 %v663
      %v848 = vpop.f32.mrb[0].mxu0
      %v849 = vadd.f32 %v740, %v848
      %v850 = vpop.f32.mrb[0].mxu0
      %851 = vmatprep.mubr.f32.mxu0 0.0
      %852 = vmatmul.mubr.f32.gmra.mrb[0].mxu0 %v664
      %v853 = vpop.f32.mrb[0].mxu0
      %v854 = vadd.f32 %v740, %v853
      %v855 = vpop.f32.mrb[0].mxu0
      %856 = vmatprep.mubr.f32.mxu0 0.0
      %857 = vmatmul.mubr.f32.gmra.mrb[0].mxu0 %v665
      %v858 = vpop.f32.mrb[0].mxu0
      %v859 = vadd.f32 %v740, %v858
      %v860 = vpop.f32.mrb[0].mxu0
      %861 = vmatprep.mubr.f32.mxu0 0.0
      %862 = vmatmul.mubr.f32.gmra.mrb[0].mxu0 %v666
      %v863 = vpop.f32.mrb[0].mxu0
      %v864 = vadd.f32 %v740, %v863
      %v865 = vpop.f32.mrb[0].mxu0
      %866 = vmatprep.mubr.f32.mxu0 0.0
      %867 = vmatmul.mubr.f32.gmra.mrb[0].mxu0 %v667
      %v868 = vpop.f32.mrb[0].mxu0
      %v869 = vadd.f32 %v740, %v868
      %v870 = vpop.f32.mrb[0].mxu0
      %871 = vmatprep.mubr.f32.mxu0 0.0
      %872 = vmatmul.mubr.f32.gmra.mrb[0].mxu0 %v668
      %v873 = vpop.f32.mrb[0].mxu0
      %v874 = vadd.f32 %v740, %v873
      %v875 = vpop.f32.mrb[0].mxu0
      %876 = vmatprep.mubr.f32.mxu0 0.0
      %877 = vmatmul.mubr.f32.gmra.mrb[0].mxu0 %v669
      %v878 = vpop.f32.mrb[0].mxu0
      %v879 = vadd.f32 %v740, %v878
      %v880 = vpop.f32.mrb[0].mxu0
      %881 = vmatprep.mubr.f32.mxu0 0.0
      %882 = vmatmul.mubr.f32.gmra.mrb[0].mxu0 %v670
      %v883 = vpop.f32.mrb[0].mxu0
      %v884 = vadd.f32 %v740, %v883
      %v885 = vpop.f32.mrb[0].mxu0
      %886 = vmatprep.mubr.f32.mxu0 0.0
      %887 = vmatmul.mubr.f32.gmra.mrb[0].mxu0 %v671
      %v888 = vpop.f32.mrb[0].mxu0
      %v889 = vadd.f32 %v740, %v888
      %v890 = vpop.f32.mrb[0].mxu0
      %891 = vmatprep.mubr.f32.mxu0 0.0
      %892 = vmatmul.mubr.f32.gmra.mrb[0].mxu0 %v672
      %v893 = vpop.f32.mrb[0].mxu0
      %v894 = vadd.f32 %v740, %v893
      %v895 = vpop.f32.mrb[0].mxu0
      %896 = vmatprep.mubr.f32.mxu0 0.0
      %897 = vmatmul.mubr.f32.gmra.mrb[0].mxu0 %v673
      %v898 = vpop.f32.mrb[0].mxu0
      %v899 = vadd.f32 %v740, %v898
      %v900 = vpop.f32.mrb[0].mxu0
      %901 = vmatprep.mubr.f32.mxu0 0.0
      %902 = vmatmul.mubr.f32.gmra.mrb[0].mxu0 %v674
      %v903 = vpop.f32.mrb[0].mxu0
      %v904 = vadd.f32 %v740, %v903
      %v905 = vpop.f32.mrb[0].mxu0
      %906 = vmatprep.mubr.f32.mxu0 0.0
      %907 = vmatmul.mubr.f32.gmra.mrb[0].mxu0 %v675
      %v908 = vpop.f32.mrb[0].mxu0
      %v909 = vadd.f32 %v740, %v908
      %v910 = vpop.f32.mrb[0].mxu0
      %911 = vmatprep.mubr.f32.mxu0 0.0
      %912 = vmatmul.mubr.f32.gmra.mrb[0].mxu0 %v676
      %v913 = vpop.f32.mrb[0].mxu0
      %v914 = vadd.f32 %v740, %v913
      %v915 = vpop.f32.mrb[0].mxu0
      %916 = vmatprep.mubr.f32.mxu0 0.0
      %917 = vmatmul.mubr.f32.gmra.mrb[0].mxu0 %v677
      %v918 = vpop.f32.mrb[0].mxu0
      %v919 = vadd.f32 %v740, %v918
      %v920 = vpop.f32.mrb[0].mxu0
      %921 = vmatprep.mubr.f32.mxu0 0.0
      %922 = vmatmul.mubr.f32.gmra.mrb[0].mxu0 %v678
      %v923 = vpop.f32.mrb[0].mxu0
      %v924 = vadd.f32 %v740, %v923
      %v925 = vpop.f32.mrb[0].mxu0
      %926 = vmatprep.mubr.f32.mxu0 0.0
      %927 = vmatmul.mubr.f32.gmra.mrb[0].mxu0 %v679
      %v928 = vpop.f32.mrb[0].mxu0
      %v929 = vadd.f32 %v740, %v928
      %v930 = vpop.f32.mrb[0].mxu0
      %931 = vmatprep.mubr.f32.mxu0 0.0
      %932 = vmatmul.mubr.f32.gmra.mrb[0].mxu0 %v680
      %v933 = vpop.f32.mrb[0].mxu0
      %v934 = vadd.f32 %v740, %v933
      %v935 = vpop.f32.mrb[0].mxu0
      %936 = vmatprep.mubr.f32.mxu0 0.0
      %937 = vmatmul.mubr.f32.gmra.mrb[0].mxu0 %v681
      %v938 = vpop.f32.mrb[0].mxu0
      %v939 = vadd.f32 %v740, %v938
      %v940 = vpop.f32.mrb[0].mxu0
      %941 = vmatprep.mubr.f32.mxu0 0.0
      %942 = vmatmul.mubr.f32.gmra.mrb[0].mxu0 %v682
      %v943 = vpop.f32.mrb[0].mxu0
      %v944 = vadd.f32 %v740, %v943
      %v945 = vpop.f32.mrb[0].mxu0
      %946 = vmatprep.mubr.f32.mxu0 0.0
      %947 = vmatmul.mubr.f32.gmra.mrb[0].mxu0 %v683
      %v948 = vpop.f32.mrb[0].mxu0
      %v949 = vadd.f32 %v740, %v948
      %v950 = vpop.f32.mrb[0].mxu0
      %951 = vmatprep.mubr.f32.mxu0 0.0
      %952 = vmatmul.mubr.f32.gmra.mrb[0].mxu0 %v684
      %v953 = vpop.f32.mrb[0].mxu0
      %v954 = vadd.f32 %v740, %v953
      %v955 = vpop.f32.mrb[0].mxu0
      %956 = vmatprep.mubr.f32.mxu0 0.0
      %957 = vmatmul.mubr.f32.gmra.mrb[0].mxu0 %v685
      %v958 = vpop.f32.mrb[0].mxu0
      %v959 = vadd.f32 %v740, %v958
      %v960 = vpop.f32.mrb[0].mxu0
      %961 = vmatprep.mubr.f32.mxu0 0.0
      %962 = vmatmul.mubr.f32.gmra.mrb[0].mxu0 %v686
      %v963 = vpop.f32.mrb[0].mxu0
      %v964 = vadd.f32 %v740, %v963
      %v965 = vpop.f32.mrb[0].mxu0
      %966 = vmatprep.mubr.f32.mxu0 0.0
      %967 = vmatmul.mubr.f32.gmra.mrb[0].mxu0 %v687
      %v968 = vpop.f32.mrb[0].mxu0
      %v969 = vadd.f32 %v740, %v968
      %v970 = vpop.f32.mrb[0].mxu0
      %971 = vmatprep.mubr.f32.mxu0 0.0
      %972 = vmatmul.mubr.f32.gmra.mrb[0].mxu0 %v688
      %v973 = vpop.f32.mrb[0].mxu0
      %v974 = vadd.f32 %v740, %v973
      %v975 = vpop.f32.mrb[0].mxu0
      %976 = vmatprep.mubr.f32.mxu0 0.0
      %977 = vmatmul.mubr.f32.gmra.mrb[0].mxu0 %v689
      %v978 = vpop.f32.mrb[0].mxu0
      %v979 = vadd.f32 %v740, %v978
      %v980 = vpop.f32.mrb[0].mxu0
      %981 = vmatprep.mubr.f32.mxu0 0.0
      %982 = vmatmul.mubr.f32.gmra.mrb[0].mxu0 %v690
      %v983 = vpop.f32.mrb[0].mxu0
      %v984 = vadd.f32 %v740, %v983
      %v985 = vpop.f32.mrb[0].mxu0
      %986 = vmatprep.mubr.f32.mxu0 0.0
      %987 = vmatmul.mubr.f32.gmra.mrb[0].mxu0 %v691
      %v988 = vpop.f32.mrb[0].mxu0
      %v989 = vadd.f32 %v740, %v988
      %v990 = vpop.f32.mrb[0].mxu0
      %991 = vmatprep.mubr.f32.mxu0 0.0
      %992 = vmatmul.mubr.f32.gmra.mrb[0].mxu0 %v692
      %v993 = vpop.f32.mrb[0].mxu0
      %v994 = vadd.f32 %v740, %v993
      %v995 = vpop.f32.mrb[0].mxu0
      %996 = vmatprep.mubr.f32.mxu0 0.0
      %997 = vmatmul.mubr.f32.gmra.mrb[0].mxu0 %v693
      %v998 = vpop.f32.mrb[0].mxu0
      %v999 = vadd.f32 %v740, %v998
      %v1000 = vpop.f32.mrb[0].mxu0
      %1001 = vmatprep.mubr.f32.mxu0 0.0
      %1002 = vmatmul.mubr.f32.gmra.mrb[0].mxu0 %v694
      %v1003 = vpop.f32.mrb[0].mxu0
      %v1004 = vadd.f32 %v740, %v1003
      %v1005 = vpop.f32.mrb[0].mxu0
      %1006 = vmatprep.mubr.f32.mxu0 0.0
      %1007 = vmatmul.mubr.f32.gmra.mrb[0].mxu0 %v695
      %v1008 = vpop.f32.mrb[0].mxu0
      %v1009 = vadd.f32 %v740, %v1008
      %v1010 = vpop.f32.mrb[0].mxu0
      %1011 = vmatprep.mubr.f32.mxu0 0.0
      %1012 = vmatmul.mubr.f32.gmra.mrb[0].mxu0 %v696
      %v1013 = vpop.f32.mrb[0].mxu0
      %v1014 = vadd.f32 %v740, %v1013
      %v1015 = vpop.f32.mrb[0].mxu0
      %1016 = vmatprep.mubr.f32.mxu0 0.0
      %1017 = vmatmul.mubr.f32.gmra.mrb[0].mxu0 %v697
      %v1018 = vpop.f32.mrb[0].mxu0
      %v1019 = vadd.f32 %v740, %v1018
      %v1020 = vpop.f32.mrb[0].mxu0
      %1021 = vmatprep.mubr.f32.mxu0 0.0
      %1022 = vmatmul.mubr.f32.gmra.mrb[0].mxu0 %v698
      %v1023 = vpop.f32.mrb[0].mxu0
      %v1024 = vadd.f32 %v740, %v1023
      %v1025 = vpop.f32.mrb[0].mxu0
      %1026 = vmatprep.mubr.f32.mxu0 0.0
      %1027 = vmatmul.mubr.f32.gmra.mrb[0].mxu0 %v699
      %v1028 = vpop.f32.mrb[0].mxu0
      %v1029 = vadd.f32 %v740, %v1028
      %v1030 = vpop.f32.mrb[0].mxu0
      %1031 = vmatprep.mubr.f32.mxu0 0.0
      %1032 = vmatmul.mubr.f32.gmra.mrb[0].mxu0 %v700
      %v1033 = vpop.f32.mrb[0].mxu0
      %v1034 = vadd.f32 %v740, %v1033
      %v1035 = vpop.f32.mrb[0].mxu0
      %1036 = vmatprep.mubr.f32.mxu0 0.0
      %1037 = vmatmul.mubr.f32.gmra.mrb[0].mxu0 %v701
      %v1038 = vpop.f32.mrb[0].mxu0
      %v1039 = vadd.f32 %v740, %v1038
      %v1040 = vpop.f32.mrb[0].mxu0
      %1041 = vmatprep.mubr.f32.mxu0 0.0
      %1042 = vmatmul.mubr.f32.gmra.mrb[0].mxu0 %v702
      %v1043 = vpop.f32.mrb[0].mxu0
      %v1044 = vadd.f32 %v740, %v1043
      %v1045 = vpop.f32.mrb[0].mxu0
      %1046 = vmatprep.mubr.f32.mxu0 0.0
      %1047 = vmatmul.mubr.f32.gmra.mrb[0].mxu0 %v703
      %v1048 = vpop.f32.mrb[0].mxu0
      %v1049 = vadd.f32 %v740, %v1048
      %v1050 = vpop.f32.mrb[0].mxu0
      %1051 = vmatprep.mubr.f32.mxu0 0.0
      %1052 = vmatmul.mubr.f32.gmra.mrb[0].mxu0 %v704
      %v1053 = vpop.f32.mrb[0].mxu0
      %v1054 = vadd.f32 %v740, %v1053
      %v1055 = vpop.f32.mrb[0].mxu0
      %1056 = vmatprep.mubr.f32.mxu0 0.0
      %1057 = vmatmul.mubr.f32.gmra.mrb[0].mxu0 %v705
      %v1058 = vpop.f32.mrb[0].mxu0
      %v1059 = vadd.f32 %v740, %v1058
      %v1060 = vpop.f32.mrb[0].mxu0
      %1061 = vmatprep.mubr.f32.mxu0 0.0
      %1062 = vmatmul.mubr.f32.gmra.mrb[0].mxu0 %v706
      %v1063 = vpop.f32.mrb[0].mxu0
      %v1064 = vadd.f32 %v740, %v1063
      %v1065 = vpop.f32.mrb[0].mxu0
      %1066 = vmatprep.mubr.f32.mxu0 0.0
      %1067 = vmatmul.mubr.f32.gmra.mrb[0].mxu0 %v707
      %v1068 = vpop.f32.mrb[0].mxu0
      %v1069 = vadd.f32 %v740, %v1068
      %v1070 = vpop.f32.mrb[0].mxu0
      %1071 = vmatprep.mubr.f32.mxu0 0.0
      %1072 = vmatmul.mubr.f32.gmra.mrb[0].mxu0 %v708
      %v1073 = vpop.f32.mrb[0].mxu0
      %v1074 = vadd.f32 %v740, %v1073
      %v1075 = vpop.f32.mrb[0].mxu0
      %1076 = vmatprep.mubr.f32.mxu0 0.0
      %1077 = vmatmul.mubr.f32.gmra.mrb[0].mxu0 %v709
      %v1078 = vpop.f32.mrb[0].mxu0
      %v1079 = vadd.f32 %v740, %v1078
      %v1080 = vpop.f32.mrb[0].mxu0
      %1081 = vmatprep.mubr.f32.mxu0 0.0
      %1082 = vmatmul.mubr.f32.gmra.mrb[0].mxu0 %v710
      %v1083 = vpop.f32.mrb[0].mxu0
      %v1084 = vadd.f32 %v740, %v1083
      %v1085 = vpop.f32.mrb[0].mxu0
      %1086 = vmatprep.mubr.f32.mxu0 0.0
      %1087 = vmatmul.mubr.f32.gmra.mrb[0].mxu0 %v711
      %v1088 = vpop.f32.mrb[0].mxu0
      %v1089 = vadd.f32 %v740, %v1088
      %v1090 = vpop.f32.mrb[0].mxu0
      %1091 = vmatprep.mubr.f32.mxu0 0.0
      %1092 = vmatmul.mubr.f32.gmra.mrb[0].mxu0 %v712
      %v1093 = vpop.f32.mrb[0].mxu0
      %v1094 = vadd.f32 %v740, %v1093
      %v1095 = vpop.f32.mrb[0].mxu0
      %1096 = vmatprep.mubr.f32.mxu0 0.0
      %1097 = vmatmul.mubr.f32.gmra.mrb[0].mxu0 %v713
      %v1098 = vpop.f32.mrb[0].mxu0
      %v1099 = vadd.f32 %v740, %v1098
      %v1100 = vpop.f32.mrb[0].mxu0
      %1101 = vmatprep.mubr.f32.mxu0 0.0
      %1102 = vmatmul.mubr.f32.gmra.mrb[0].mxu0 %v714
      %v1103 = vpop.f32.mrb[0].mxu0
      %v1104 = vadd.f32 %v740, %v1103
      %v1105 = vpop.f32.mrb[0].mxu0
      %1106 = vmatprep.mubr.f32.mxu0 0.0
      %1107 = vmatmul.mubr.f32.gmra.mrb[0].mxu0 %v715
      %v1108 = vpop.f32.mrb[0].mxu0
      %v1109 = vadd.f32 %v740, %v1108
      %v1110 = vpop.f32.mrb[0].mxu0
      %1111 = vmatprep.mubr.f32.mxu0 0.0
      %1112 = vmatmul.mubr.f32.gmra.mrb[0].mxu0 %v716
      %v1113 = vpop.f32.mrb[0].mxu0
      %v1114 = vadd.f32 %v740, %v1113
      %v1115 = vpop.f32.mrb[0].mxu0
      %1116 = vmatprep.mubr.f32.mxu0 0.0
      %1117 = vmatmul.mubr.f32.gmra.mrb[0].mxu0 %v717
      %v1118 = vpop.f32.mrb[0].mxu0
      %v1119 = vadd.f32 %v740, %v1118
      %v1120 = vpop.f32.mrb[0].mxu0
      %1121 = vmatprep.mubr.f32.mxu0 0.0
      %1122 = vmatmul.mubr.f32.gmra.mrb[0].mxu0 %v718
      %v1123 = vpop.f32.mrb[0].mxu0
      %v1124 = vadd.f32 %v740, %v1123
      %v1125 = vpop.f32.mrb[0].mxu0
      %1126 = vdwg.mxu0
      %v1127 = vmax.f32 %v809, 0.0
      %v1128 = vmax.f32 %v814, 0.0
      %v1129 = vmax.f32 %v819, 0.0
      %v1130 = vmax.f32 %v824, 0.0
      %v1131 = vmax.f32 %v829, 0.0
      %v1132 = vmax.f32 %v834, 0.0
      %v1133 = vmax.f32 %v839, 0.0
      %v1134 = vmax.f32 %v844, 0.0
      %v1135 = vmax.f32 %v849, 0.0
      %v1136 = vmax.f32 %v854, 0.0
      %v1137 = vmax.f32 %v859, 0.0
      %v1138 = vmax.f32 %v864, 0.0
      %v1139 = vmax.f32 %v869, 0.0
      %v1140 = vmax.f32 %v874, 0.0
      %v1141 = vmax.f32 %v879, 0.0
      %v1142 = vmax.f32 %v884, 0.0
      %v1143 = vmax.f32 %v889, 0.0
      %v1144 = vmax.f32 %v894, 0.0
      %v1145 = vmax.f32 %v899, 0.0
      %v1146 = vmax.f32 %v904, 0.0
      %v1147 = vmax.f32 %v909, 0.0
      %v1148 = vmax.f32 %v914, 0.0
      %v1149 = vmax.f32 %v919, 0.0
      %v1150 = vmax.f32 %v924, 0.0
      %v1151 = vmax.f32 %v929, 0.0
      %v1152 = vmax.f32 %v934, 0.0
      %v1153 = vmax.f32 %v939, 0.0
      %v1154 = vmax.f32 %v944, 0.0
      %v1155 = vmax.f32 %v949, 0.0
      %v1156 = vmax.f32 %v954, 0.0
      %v1157 = vmax.f32 %v959, 0.0
      %v1158 = vmax.f32 %v964, 0.0
      %v1159 = vmax.f32 %v969, 0.0
      %v1160 = vmax.f32 %v974, 0.0
      %v1161 = vmax.f32 %v979, 0.0
      %v1162 = vmax.f32 %v984, 0.0
      %v1163 = vmax.f32 %v989, 0.0
      %v1164 = vmax.f32 %v994, 0.0
      %v1165 = vmax.f32 %v999, 0.0
      %v1166 = vmax.f32 %v1004, 0.0
      %v1167 = vmax.f32 %v1009, 0.0
      %v1168 = vmax.f32 %v1014, 0.0
      %v1169 = vmax.f32 %v1019, 0.0
      %v1170 = vmax.f32 %v1024, 0.0
      %v1171 = vmax.f32 %v1029, 0.0
      %v1172 = vmax.f32 %v1034, 0.0
      %v1173 = vmax.f32 %v1039, 0.0
      %v1174 = vmax.f32 %v1044, 0.0
      %v1175 = vmax.f32 %v1049, 0.0
      %v1176 = vmax.f32 %v1054, 0.0
      %v1177 = vmax.f32 %v1059, 0.0
      %v1178 = vmax.f32 %v1064, 0.0
      %v1179 = vmax.f32 %v1069, 0.0
      %v1180 = vmax.f32 %v1074, 0.0
      %v1181 = vmax.f32 %v1079, 0.0
      %v1182 = vmax.f32 %v1084, 0.0
      %v1183 = vmax.f32 %v1089, 0.0
      %v1184 = vmax.f32 %v1094, 0.0
      %v1185 = vmax.f32 %v1099, 0.0
      %v1186 = vmax.f32 %v1104, 0.0
      %v1187 = vmax.f32 %v1109, 0.0
      %v1188 = vmax.f32 %v1114, 0.0
      %v1189 = vmax.f32 %v1119, 0.0
      %v1190 = vmax.f32 %v1124, 0.0
      %v1191 = vld [vmem:[%s4] sm:$0xff]
      %v1192 = vld [vmem:[%s4 + $0x8] sm:$0xff]
      %v1193 = vld [vmem:[%s4 + $0x10] sm:$0xff]
      %v1194 = vld [vmem:[%s4 + $0x18] sm:$0xff]
      %v1195 = vld [vmem:[%s4 + $0x20] sm:$0xff]
      %v1196 = vld [vmem:[%s4 + $0x28] sm:$0xff]
      %v1197 = vld [vmem:[%s4 + $0x30] sm:$0xff]
      %v1198 = vld [vmem:[%s4 + $0x38] sm:$0xff]
      %v1199 = vld [vmem:[%s4 + $0x40] sm:$0xff]
      %v1200 = vld [vmem:[%s4 + $0x48] sm:$0xff]
      %v1201 = vld [vmem:[%s4 + $0x50] sm:$0xff]
      %v1202 = vld [vmem:[%s4 + $0x58] sm:$0xff]
      %v1203 = vld [vmem:[%s4 + $0x60] sm:$0xff]
      %v1204 = vld [vmem:[%s4 + $0x68] sm:$0xff]
      %v1205 = vld [vmem:[%s4 + $0x70] sm:$0xff]
      %v1206 = vld [vmem:[%s4 + $0x78] sm:$0xff]
      %v1207 = vld [vmem:[%s5] sm:$0x1]
      %v1209 = vlaneseq
      %v1210 = vshrl.u32 %v1209, 7
      %v1211 = vsub.s32 0, %v1210
      %v1212 = vrot.slane %v1207, %v1211
      %1214 = vmatprep.subr.mxu0 0.0
      %1215 = vmatpush1.msra.mxu0 %v1191
      %1216 = vmatprep.subr.mxu0 0.0
      %1217 = vmatpush1.msra.mxu0 %v1192
      %1218 = vmatprep.subr.mxu0 0.0
      %1219 = vmatpush1.msra.mxu0 %v1193
      %1220 = vmatprep.subr.mxu0 0.0
      %1221 = vmatpush1.msra.mxu0 %v1194
      %1222 = vmatprep.subr.mxu0 0.0
      %1223 = vmatpush1.msra.mxu0 %v1195
      %1224 = vmatprep.subr.mxu0 0.0
      %1225 = vmatpush1.msra.mxu0 %v1196
      %1226 = vmatprep.subr.mxu0 0.0
      %1227 = vmatpush1.msra.mxu0 %v1197
      %1228 = vmatprep.subr.mxu0 0.0
      %1229 = vmatpush1.msra.mxu0 %v1198
      %1230 = vmatprep.subr.mxu0 0.0
      %1231 = vmatpush1.msra.mxu0 %v1199
      %1232 = vmatprep.subr.mxu0 0.0
      %1233 = vmatpush1.msra.mxu0 %v1200
      %1234 = vmatprep.subr.mxu0 0.0
      %1235 = vmatpush1.msra.mxu0 %v1201
      %1236 = vmatprep.subr.mxu0 0.0
      %1237 = vmatpush1.msra.mxu0 %v1202
      %1238 = vmatprep.subr.mxu0 0.0
      %1239 = vmatpush1.msra.mxu0 %v1203
      %1240 = vmatprep.subr.mxu0 0.0
      %1241 = vmatpush1.msra.mxu0 %v1204
      %1242 = vmatprep.subr.mxu0 0.0
      %1243 = vmatpush1.msra.mxu0 %v1205
      %1244 = vmatprep.subr.mxu0 0.0
      %1245 = vmatpush1.msra.mxu0 %v1206
      %1246 = vmatprep.subr.mxu0 0.0
      %1247 = vmatpush1.msra.mxu0 0.0
      %1248 = vmatprep.subr.mxu0 0.0
      %1249 = vmatpush1.msra.mxu0 0.0
      %1250 = vmatprep.subr.mxu0 0.0
      %1251 = vmatpush1.msra.mxu0 0.0
      %1252 = vmatprep.subr.mxu0 0.0
      %1253 = vmatpush1.msra.mxu0 0.0
      %1254 = vmatprep.subr.mxu0 0.0
      %1255 = vmatpush1.msra.mxu0 0.0
      %1256 = vmatprep.subr.mxu0 0.0
      %1257 = vmatpush1.msra.mxu0 0.0
      %1258 = vmatprep.subr.mxu0 0.0
      %1259 = vmatpush1.msra.mxu0 0.0
      %1260 = vmatprep.subr.mxu0 0.0
      %1261 = vmatpush1.msra.mxu0 0.0
      %1262 = vmatprep.subr.mxu0 0.0
      %1263 = vmatpush1.msra.mxu0 0.0
      %1264 = vmatprep.subr.mxu0 0.0
      %1265 = vmatpush1.msra.mxu0 0.0
      %1266 = vmatprep.subr.mxu0 0.0
      %1267 = vmatpush1.msra.mxu0 0.0
      %1268 = vmatprep.subr.mxu0 0.0
      %1269 = vmatpush1.msra.mxu0 0.0
      %1270 = vmatprep.subr.mxu0 0.0
      %1271 = vmatpush1.msra.mxu0 0.0
      %1272 = vmatprep.subr.mxu0 0.0
      %1273 = vmatpush1.msra.mxu0 0.0
      %1274 = vmatprep.subr.mxu0 0.0
      %1275 = vmatpush1.msra.mxu0 0.0
      %1276 = vmatprep.subr.mxu0 0.0
      %1277 = vmatpush1.msra.mxu0 0.0
      %1278 = vmatprep.mubr.f32.mxu0 0.0
      %1279 = vmatmul.mubr.f32.gmra.mrb[0].mxu0 %v1127
      %v1280 = vpop.f32.mrb[0].mxu0
      %v1281 = vadd.f32 %v1212, %v1280
      %v1282 = vpop.f32.mrb[0].mxu0
      %1283 = vmatprep.mubr.f32.mxu0 0.0
      %1284 = vmatmul.mubr.f32.gmra.mrb[0].mxu0 %v1128
      %v1285 = vpop.f32.mrb[0].mxu0
      %v1286 = vadd.f32 %v1212, %v1285
      %v1287 = vpop.f32.mrb[0].mxu0
      %1288 = vmatprep.mubr.f32.mxu0 0.0
      %1289 = vmatmul.mubr.f32.gmra.mrb[0].mxu0 %v1129
      %v1290 = vpop.f32.mrb[0].mxu0
      %v1291 = vadd.f32 %v1212, %v1290
      %v1292 = vpop.f32.mrb[0].mxu0
      %1293 = vmatprep.mubr.f32.mxu0 0.0
      %1294 = vmatmul.mubr.f32.gmra.mrb[0].mxu0 %v1130
      %v1295 = vpop.f32.mrb[0].mxu0
      %v1296 = vadd.f32 %v1212, %v1295
      %v1297 = vpop.f32.mrb[0].mxu0
      %1298 = vmatprep.mubr.f32.mxu0 0.0
      %1299 = vmatmul.mubr.f32.gmra.mrb[0].mxu0 %v1131
      %v1300 = vpop.f32.mrb[0].mxu0
      %v1301 = vadd.f32 %v1212, %v1300
      %v1302 = vpop.f32.mrb[0].mxu0
      %1303 = vmatprep.mubr.f32.mxu0 0.0
      %1304 = vmatmul.mubr.f32.gmra.mrb[0].mxu0 %v1132
      %v1305 = vpop.f32.mrb[0].mxu0
      %v1306 = vadd.f32 %v1212, %v1305
      %v1307 = vpop.f32.mrb[0].mxu0
      %1308 = vmatprep.mubr.f32.mxu0 0.0
      %1309 = vmatmul.mubr.f32.gmra.mrb[0].mxu0 %v1133
      %v1310 = vpop.f32.mrb[0].mxu0
      %v1311 = vadd.f32 %v1212, %v1310
      %v1312 = vpop.f32.mrb[0].mxu0
      %1313 = vmatprep.mubr.f32.mxu0 0.0
      %1314 = vmatmul.mubr.f32.gmra.mrb[0].mxu0 %v1134
      %v1315 = vpop.f32.mrb[0].mxu0
      %v1316 = vadd.f32 %v1212, %v1315
      %v1317 = vpop.f32.mrb[0].mxu0
      %1318 = vmatprep.mubr.f32.mxu0 0.0
      %1319 = vmatmul.mubr.f32.gmra.mrb[0].mxu0 %v1135
      %v1320 = vpop.f32.mrb[0].mxu0
      %v1321 = vadd.f32 %v1212, %v1320
      %v1322 = vpop.f32.mrb[0].mxu0
      %1323 = vmatprep.mubr.f32.mxu0 0.0
      %1324 = vmatmul.mubr.f32.gmra.mrb[0].mxu0 %v1136
      %v1325 = vpop.f32.mrb[0].mxu0
      %v1326 = vadd.f32 %v1212, %v1325
      %v1327 = vpop.f32.mrb[0].mxu0
      %1328 = vmatprep.mubr.f32.mxu0 0.0
      %1329 = vmatmul.mubr.f32.gmra.mrb[0].mxu0 %v1137
      %v1330 = vpop.f32.mrb[0].mxu0
      %v1331 = vadd.f32 %v1212, %v1330
      %v1332 = vpop.f32.mrb[0].mxu0
      %1333 = vmatprep.mubr.f32.mxu0 0.0
      %1334 = vmatmul.mubr.f32.gmra.mrb[0].mxu0 %v1138
      %v1335 = vpop.f32.mrb[0].mxu0
      %v1336 = vadd.f32 %v1212, %v1335
      %v1337 = vpop.f32.mrb[0].mxu0
      %1338 = vmatprep.mubr.f32.mxu0 0.0
      %1339 = vmatmul.mubr.f32.gmra.mrb[0].mxu0 %v1139
      %v1340 = vpop.f32.mrb[0].mxu0
      %v1341 = vadd.f32 %v1212, %v1340
      %v1342 = vpop.f32.mrb[0].mxu0
      %1343 = vmatprep.mubr.f32.mxu0 0.0
      %1344 = vmatmul.mubr.f32.gmra.mrb[0].mxu0 %v1140
      %v1345 = vpop.f32.mrb[0].mxu0
      %v1346 = vadd.f32 %v1212, %v1345
      %v1347 = vpop.f32.mrb[0].mxu0
      %1348 = vmatprep.mubr.f32.mxu0 0.0
      %1349 = vmatmul.mubr.f32.gmra.mrb[0].mxu0 %v1141
      %v1350 = vpop.f32.mrb[0].mxu0
      %v1351 = vadd.f32 %v1212, %v1350
      %v1352 = vpop.f32.mrb[0].mxu0
      %1353 = vmatprep.mubr.f32.mxu0 0.0
      %1354 = vmatmul.mubr.f32.gmra.mrb[0].mxu0 %v1142
      %v1355 = vpop.f32.mrb[0].mxu0
      %v1356 = vadd.f32 %v1212, %v1355
      %v1357 = vpop.f32.mrb[0].mxu0
      %1358 = vmatprep.mubr.f32.mxu0 0.0
      %1359 = vmatmul.mubr.f32.gmra.mrb[0].mxu0 %v1143
      %v1360 = vpop.f32.mrb[0].mxu0
      %v1361 = vadd.f32 %v1212, %v1360
      %v1362 = vpop.f32.mrb[0].mxu0
      %1363 = vmatprep.mubr.f32.mxu0 0.0
      %1364 = vmatmul.mubr.f32.gmra.mrb[0].mxu0 %v1144
      %v1365 = vpop.f32.mrb[0].mxu0
      %v1366 = vadd.f32 %v1212, %v1365
      %v1367 = vpop.f32.mrb[0].mxu0
      %1368 = vmatprep.mubr.f32.mxu0 0.0
      %1369 = vmatmul.mubr.f32.gmra.mrb[0].mxu0 %v1145
      %v1370 = vpop.f32.mrb[0].mxu0
      %v1371 = vadd.f32 %v1212, %v1370
      %v1372 = vpop.f32.mrb[0].mxu0
      %1373 = vmatprep.mubr.f32.mxu0 0.0
      %1374 = vmatmul.mubr.f32.gmra.mrb[0].mxu0 %v1146
      %v1375 = vpop.f32.mrb[0].mxu0
      %v1376 = vadd.f32 %v1212, %v1375
      %v1377 = vpop.f32.mrb[0].mxu0
      %1378 = vmatprep.mubr.f32.mxu0 0.0
      %1379 = vmatmul.mubr.f32.gmra.mrb[0].mxu0 %v1147
      %v1380 = vpop.f32.mrb[0].mxu0
      %v1381 = vadd.f32 %v1212, %v1380
      %v1382 = vpop.f32.mrb[0].mxu0
      %1383 = vmatprep.mubr.f32.mxu0 0.0
      %1384 = vmatmul.mubr.f32.gmra.mrb[0].mxu0 %v1148
      %v1385 = vpop.f32.mrb[0].mxu0
      %v1386 = vadd.f32 %v1212, %v1385
      %v1387 = vpop.f32.mrb[0].mxu0
      %1388 = vmatprep.mubr.f32.mxu0 0.0
      %1389 = vmatmul.mubr.f32.gmra.mrb[0].mxu0 %v1149
      %v1390 = vpop.f32.mrb[0].mxu0
      %v1391 = vadd.f32 %v1212, %v1390
      %v1392 = vpop.f32.mrb[0].mxu0
      %1393 = vmatprep.mubr.f32.mxu0 0.0
      %1394 = vmatmul.mubr.f32.gmra.mrb[0].mxu0 %v1150
      %v1395 = vpop.f32.mrb[0].mxu0
      %v1396 = vadd.f32 %v1212, %v1395
      %v1397 = vpop.f32.mrb[0].mxu0
      %1398 = vmatprep.mubr.f32.mxu0 0.0
      %1399 = vmatmul.mubr.f32.gmra.mrb[0].mxu0 %v1151
      %v1400 = vpop.f32.mrb[0].mxu0
      %v1401 = vadd.f32 %v1212, %v1400
      %v1402 = vpop.f32.mrb[0].mxu0
      %1403 = vmatprep.mubr.f32.mxu0 0.0
      %1404 = vmatmul.mubr.f32.gmra.mrb[0].mxu0 %v1152
      %v1405 = vpop.f32.mrb[0].mxu0
      %v1406 = vadd.f32 %v1212, %v1405
      %v1407 = vpop.f32.mrb[0].mxu0
      %1408 = vmatprep.mubr.f32.mxu0 0.0
      %1409 = vmatmul.mubr.f32.gmra.mrb[0].mxu0 %v1153
      %v1410 = vpop.f32.mrb[0].mxu0
      %v1411 = vadd.f32 %v1212, %v1410
      %v1412 = vpop.f32.mrb[0].mxu0
      %1413 = vmatprep.mubr.f32.mxu0 0.0
      %1414 = vmatmul.mubr.f32.gmra.mrb[0].mxu0 %v1154
      %v1415 = vpop.f32.mrb[0].mxu0
      %v1416 = vadd.f32 %v1212, %v1415
      %v1417 = vpop.f32.mrb[0].mxu0
      %1418 = vmatprep.mubr.f32.mxu0 0.0
      %1419 = vmatmul.mubr.f32.gmra.mrb[0].mxu0 %v1155
      %v1420 = vpop.f32.mrb[0].mxu0
      %v1421 = vadd.f32 %v1212, %v1420
      %v1422 = vpop.f32.mrb[0].mxu0
      %1423 = vmatprep.mubr.f32.mxu0 0.0
      %1424 = vmatmul.mubr.f32.gmra.mrb[0].mxu0 %v1156
      %v1425 = vpop.f32.mrb[0].mxu0
      %v1426 = vadd.f32 %v1212, %v1425
      %v1427 = vpop.f32.mrb[0].mxu0
      %1428 = vmatprep.mubr.f32.mxu0 0.0
      %1429 = vmatmul.mubr.f32.gmra.mrb[0].mxu0 %v1157
      %v1430 = vpop.f32.mrb[0].mxu0
      %v1431 = vadd.f32 %v1212, %v1430
      %v1432 = vpop.f32.mrb[0].mxu0
      %1433 = vmatprep.mubr.f32.mxu0 0.0
      %1434 = vmatmul.mubr.f32.gmra.mrb[0].mxu0 %v1158
      %v1435 = vpop.f32.mrb[0].mxu0
      %v1436 = vadd.f32 %v1212, %v1435
      %v1437 = vpop.f32.mrb[0].mxu0
      %1438 = vmatprep.mubr.f32.mxu0 0.0
      %1439 = vmatmul.mubr.f32.gmra.mrb[0].mxu0 %v1159
      %v1440 = vpop.f32.mrb[0].mxu0
      %v1441 = vadd.f32 %v1212, %v1440
      %v1442 = vpop.f32.mrb[0].mxu0
      %1443 = vmatprep.mubr.f32.mxu0 0.0
      %1444 = vmatmul.mubr.f32.gmra.mrb[0].mxu0 %v1160
      %v1445 = vpop.f32.mrb[0].mxu0
      %v1446 = vadd.f32 %v1212, %v1445
      %v1447 = vpop.f32.mrb[0].mxu0
      %1448 = vmatprep.mubr.f32.mxu0 0.0
      %1449 = vmatmul.mubr.f32.gmra.mrb[0].mxu0 %v1161
      %v1450 = vpop.f32.mrb[0].mxu0
      %v1451 = vadd.f32 %v1212, %v1450
      %v1452 = vpop.f32.mrb[0].mxu0
      %1453 = vmatprep.mubr.f32.mxu0 0.0
      %1454 = vmatmul.mubr.f32.gmra.mrb[0].mxu0 %v1162
      %v1455 = vpop.f32.mrb[0].mxu0
      %v1456 = vadd.f32 %v1212, %v1455
      %v1457 = vpop.f32.mrb[0].mxu0
      %1458 = vmatprep.mubr.f32.mxu0 0.0
      %1459 = vmatmul.mubr.f32.gmra.mrb[0].mxu0 %v1163
      %v1460 = vpop.f32.mrb[0].mxu0
      %v1461 = vadd.f32 %v1212, %v1460
      %v1462 = vpop.f32.mrb[0].mxu0
      %1463 = vmatprep.mubr.f32.mxu0 0.0
      %1464 = vmatmul.mubr.f32.gmra.mrb[0].mxu0 %v1164
      %v1465 = vpop.f32.mrb[0].mxu0
      %v1466 = vadd.f32 %v1212, %v1465
      %v1467 = vpop.f32.mrb[0].mxu0
      %1468 = vmatprep.mubr.f32.mxu0 0.0
      %1469 = vmatmul.mubr.f32.gmra.mrb[0].mxu0 %v1165
      %v1470 = vpop.f32.mrb[0].mxu0
      %v1471 = vadd.f32 %v1212, %v1470
      %v1472 = vpop.f32.mrb[0].mxu0
      %1473 = vmatprep.mubr.f32.mxu0 0.0
      %1474 = vmatmul.mubr.f32.gmra.mrb[0].mxu0 %v1166
      %v1475 = vpop.f32.mrb[0].mxu0
      %v1476 = vadd.f32 %v1212, %v1475
      %v1477 = vpop.f32.mrb[0].mxu0
      %1478 = vmatprep.mubr.f32.mxu0 0.0
      %1479 = vmatmul.mubr.f32.gmra.mrb[0].mxu0 %v1167
      %v1480 = vpop.f32.mrb[0].mxu0
      %v1481 = vadd.f32 %v1212, %v1480
      %v1482 = vpop.f32.mrb[0].mxu0
      %1483 = vmatprep.mubr.f32.mxu0 0.0
      %1484 = vmatmul.mubr.f32.gmra.mrb[0].mxu0 %v1168
      %v1485 = vpop.f32.mrb[0].mxu0
      %v1486 = vadd.f32 %v1212, %v1485
      %v1487 = vpop.f32.mrb[0].mxu0
      %1488 = vmatprep.mubr.f32.mxu0 0.0
      %1489 = vmatmul.mubr.f32.gmra.mrb[0].mxu0 %v1169
      %v1490 = vpop.f32.mrb[0].mxu0
      %v1491 = vadd.f32 %v1212, %v1490
      %v1492 = vpop.f32.mrb[0].mxu0
      %1493 = vmatprep.mubr.f32.mxu0 0.0
      %1494 = vmatmul.mubr.f32.gmra.mrb[0].mxu0 %v1170
      %v1495 = vpop.f32.mrb[0].mxu0
      %v1496 = vadd.f32 %v1212, %v1495
      %v1497 = vpop.f32.mrb[0].mxu0
      %1498 = vmatprep.mubr.f32.mxu0 0.0
      %1499 = vmatmul.mubr.f32.gmra.mrb[0].mxu0 %v1171
      %v1500 = vpop.f32.mrb[0].mxu0
      %v1501 = vadd.f32 %v1212, %v1500
      %v1502 = vpop.f32.mrb[0].mxu0
      %1503 = vmatprep.mubr.f32.mxu0 0.0
      %1504 = vmatmul.mubr.f32.gmra.mrb[0].mxu0 %v1172
      %v1505 = vpop.f32.mrb[0].mxu0
      %v1506 = vadd.f32 %v1212, %v1505
      %v1507 = vpop.f32.mrb[0].mxu0
      %1508 = vmatprep.mubr.f32.mxu0 0.0
      %1509 = vmatmul.mubr.f32.gmra.mrb[0].mxu0 %v1173
      %v1510 = vpop.f32.mrb[0].mxu0
      %v1511 = vadd.f32 %v1212, %v1510
      %v1512 = vpop.f32.mrb[0].mxu0
      %1513 = vmatprep.mubr.f32.mxu0 0.0
      %1514 = vmatmul.mubr.f32.gmra.mrb[0].mxu0 %v1174
      %v1515 = vpop.f32.mrb[0].mxu0
      %v1516 = vadd.f32 %v1212, %v1515
      %v1517 = vpop.f32.mrb[0].mxu0
      %1518 = vmatprep.mubr.f32.mxu0 0.0
      %1519 = vmatmul.mubr.f32.gmra.mrb[0].mxu0 %v1175
      %v1520 = vpop.f32.mrb[0].mxu0
      %v1521 = vadd.f32 %v1212, %v1520
      %v1522 = vpop.f32.mrb[0].mxu0
      %1523 = vmatprep.mubr.f32.mxu0 0.0
      %1524 = vmatmul.mubr.f32.gmra.mrb[0].mxu0 %v1176
      %v1525 = vpop.f32.mrb[0].mxu0
      %v1526 = vadd.f32 %v1212, %v1525
      %v1527 = vpop.f32.mrb[0].mxu0
      %1528 = vmatprep.mubr.f32.mxu0 0.0
      %1529 = vmatmul.mubr.f32.gmra.mrb[0].mxu0 %v1177
      %v1530 = vpop.f32.mrb[0].mxu0
      %v1531 = vadd.f32 %v1212, %v1530
      %v1532 = vpop.f32.mrb[0].mxu0
      %1533 = vmatprep.mubr.f32.mxu0 0.0
      %1534 = vmatmul.mubr.f32.gmra.mrb[0].mxu0 %v1178
      %v1535 = vpop.f32.mrb[0].mxu0
      %v1536 = vadd.f32 %v1212, %v1535
      %v1537 = vpop.f32.mrb[0].mxu0
      %1538 = vmatprep.mubr.f32.mxu0 0.0
      %1539 = vmatmul.mubr.f32.gmra.mrb[0].mxu0 %v1179
      %v1540 = vpop.f32.mrb[0].mxu0
      %v1541 = vadd.f32 %v1212, %v1540
      %v1542 = vpop.f32.mrb[0].mxu0
      %1543 = vmatprep.mubr.f32.mxu0 0.0
      %1544 = vmatmul.mubr.f32.gmra.mrb[0].mxu0 %v1180
      %v1545 = vpop.f32.mrb[0].mxu0
      %v1546 = vadd.f32 %v1212, %v1545
      %v1547 = vpop.f32.mrb[0].mxu0
      %1548 = vmatprep.mubr.f32.mxu0 0.0
      %1549 = vmatmul.mubr.f32.gmra.mrb[0].mxu0 %v1181
      %v1550 = vpop.f32.mrb[0].mxu0
      %v1551 = vadd.f32 %v1212, %v1550
      %v1552 = vpop.f32.mrb[0].mxu0
      %1553 = vmatprep.mubr.f32.mxu0 0.0
      %1554 = vmatmul.mubr.f32.gmra.mrb[0].mxu0 %v1182
      %v1555 = vpop.f32.mrb[0].mxu0
      %v1556 = vadd.f32 %v1212, %v1555
      %v1557 = vpop.f32.mrb[0].mxu0
      %1558 = vmatprep.mubr.f32.mxu0 0.0
      %1559 = vmatmul.mubr.f32.gmra.mrb[0].mxu0 %v1183
      %v1560 = vpop.f32.mrb[0].mxu0
      %v1561 = vadd.f32 %v1212, %v1560
      %v1562 = vpop.f32.mrb[0].mxu0
      %1563 = vmatprep.mubr.f32.mxu0 0.0
      %1564 = vmatmul.mubr.f32.gmra.mrb[0].mxu0 %v1184
      %v1565 = vpop.f32.mrb[0].mxu0
      %v1566 = vadd.f32 %v1212, %v1565
      %v1567 = vpop.f32.mrb[0].mxu0
      %1568 = vmatprep.mubr.f32.mxu0 0.0
      %1569 = vmatmul.mubr.f32.gmra.mrb[0].mxu0 %v1185
      %v1570 = vpop.f32.mrb[0].mxu0
      %v1571 = vadd.f32 %v1212, %v1570
      %v1572 = vpop.f32.mrb[0].mxu0
      %1573 = vmatprep.mubr.f32.mxu0 0.0
      %1574 = vmatmul.mubr.f32.gmra.mrb[0].mxu0 %v1186
      %v1575 = vpop.f32.mrb[0].mxu0
      %v1576 = vadd.f32 %v1212, %v1575
      %v1577 = vpop.f32.mrb[0].mxu0
      %1578 = vmatprep.mubr.f32.mxu0 0.0
      %1579 = vmatmul.mubr.f32.gmra.mrb[0].mxu0 %v1187
      %v1580 = vpop.f32.mrb[0].mxu0
      %v1581 = vadd.f32 %v1212, %v1580
      %v1582 = vpop.f32.mrb[0].mxu0
      %1583 = vmatprep.mubr.f32.mxu0 0.0
      %1584 = vmatmul.mubr.f32.gmra.mrb[0].mxu0 %v1188
      %v1585 = vpop.f32.mrb[0].mxu0
      %v1586 = vadd.f32 %v1212, %v1585
      %v1587 = vpop.f32.mrb[0].mxu0
      %1588 = vmatprep.mubr.f32.mxu0 0.0
      %1589 = vmatmul.mubr.f32.gmra.mrb[0].mxu0 %v1189
      %v1590 = vpop.f32.mrb[0].mxu0
      %v1591 = vadd.f32 %v1212, %v1590
      %v1592 = vpop.f32.mrb[0].mxu0
      %1593 = vmatprep.mubr.f32.mxu0 0.0
      %1594 = vmatmul.mubr.f32.gmra.mrb[0].mxu0 %v1190
      %v1595 = vpop.f32.mrb[0].mxu0
      %v1596 = vadd.f32 %v1212, %v1595
      %v1597 = vpop.f32.mrb[0].mxu0
      %1598 = vdwg.mxu0
      %v1599 = vsub.f32 0.0, %v1281
      %v1600 = vsub.f32 0.0, %v1286
      %v1601 = vsub.f32 0.0, %v1291
      %v1602 = vsub.f32 0.0, %v1296
      %v1603 = vsub.f32 0.0, %v1301
      %v1604 = vsub.f32 0.0, %v1306
      %v1605 = vsub.f32 0.0, %v1311
      %v1606 = vsub.f32 0.0, %v1316
      %v1607 = vsub.f32 0.0, %v1321
      %v1608 = vsub.f32 0.0, %v1326
      %v1609 = vsub.f32 0.0, %v1331
      %v1610 = vsub.f32 0.0, %v1336
      %v1611 = vsub.f32 0.0, %v1341
      %v1612 = vsub.f32 0.0, %v1346
      %v1613 = vsub.f32 0.0, %v1351
      %v1614 = vsub.f32 0.0, %v1356
      %v1615 = vsub.f32 0.0, %v1361
      %v1616 = vsub.f32 0.0, %v1366
      %v1617 = vsub.f32 0.0, %v1371
      %v1618 = vsub.f32 0.0, %v1376
      %v1619 = vsub.f32 0.0, %v1381
      %v1620 = vsub.f32 0.0, %v1386
      %v1621 = vsub.f32 0.0, %v1391
      %v1622 = vsub.f32 0.0, %v1396
      %v1623 = vsub.f32 0.0, %v1401
      %v1624 = vsub.f32 0.0, %v1406
      %v1625 = vsub.f32 0.0, %v1411
      %v1626 = vsub.f32 0.0, %v1416
      %v1627 = vsub.f32 0.0, %v1421
      %v1628 = vsub.f32 0.0, %v1426
      %v1629 = vsub.f32 0.0, %v1431
      %v1630 = vsub.f32 0.0, %v1436
      %v1631 = vsub.f32 0.0, %v1441
      %v1632 = vsub.f32 0.0, %v1446
      %v1633 = vsub.f32 0.0, %v1451
      %v1634 = vsub.f32 0.0, %v1456
      %v1635 = vsub.f32 0.0, %v1461
      %v1636 = vsub.f32 0.0, %v1466
      %v1637 = vsub.f32 0.0, %v1471
      %v1638 = vsub.f32 0.0, %v1476
      %v1639 = vsub.f32 0.0, %v1481
      %v1640 = vsub.f32 0.0, %v1486
      %v1641 = vsub.f32 0.0, %v1491
      %v1642 = vsub.f32 0.0, %v1496
      %v1643 = vsub.f32 0.0, %v1501
      %v1644 = vsub.f32 0.0, %v1506
      %v1645 = vsub.f32 0.0, %v1511
      %v1646 = vsub.f32 0.0, %v1516
      %v1647 = vsub.f32 0.0, %v1521
      %v1648 = vsub.f32 0.0, %v1526
      %v1649 = vsub.f32 0.0, %v1531
      %v1650 = vsub.f32 0.0, %v1536
      %v1651 = vsub.f32 0.0, %v1541
      %v1652 = vsub.f32 0.0, %v1546
      %v1653 = vsub.f32 0.0, %v1551
      %v1654 = vsub.f32 0.0, %v1556
      %v1655 = vsub.f32 0.0, %v1561
      %v1656 = vsub.f32 0.0, %v1566
      %v1657 = vsub.f32 0.0, %v1571
      %v1658 = vsub.f32 0.0, %v1576
      %v1659 = vsub.f32 0.0, %v1581
      %v1660 = vsub.f32 0.0, %v1586
      %v1661 = vsub.f32 0.0, %v1591
      %v1662 = vsub.f32 0.0, %v1596
      %v1663 = vmul.f32 %v1599, 1.442695
      %v1664 = vpow.pop %v1663
      %v1665 = vmul.f32 %v1600, 1.442695
      %v1666 = vpow.pop %v1665
      %v1667 = vmul.f32 %v1601, 1.442695
      %v1668 = vpow.pop %v1667
      %v1669 = vmul.f32 %v1602, 1.442695
      %v1670 = vpow.pop %v1669
      %v1671 = vmul.f32 %v1603, 1.442695
      %v1672 = vpow.pop %v1671
      %v1673 = vmul.f32 %v1604, 1.442695
      %v1674 = vpow.pop %v1673
      %v1675 = vmul.f32 %v1605, 1.442695
      %v1676 = vpow.pop %v1675
      %v1677 = vmul.f32 %v1606, 1.442695
      %v1678 = vpow.pop %v1677
      %v1679 = vmul.f32 %v1607, 1.442695
      %v1680 = vpow.pop %v1679
      %v1681 = vmul.f32 %v1608, 1.442695
      %v1682 = vpow.pop %v1681
      %v1683 = vmul.f32 %v1609, 1.442695
      %v1684 = vpow.pop %v1683
      %v1685 = vmul.f32 %v1610, 1.442695
      %v1686 = vpow.pop %v1685
      %v1687 = vmul.f32 %v1611, 1.442695
      %v1688 = vpow.pop %v1687
      %v1689 = vmul.f32 %v1612, 1.442695
      %v1690 = vpow.pop %v1689
      %v1691 = vmul.f32 %v1613, 1.442695
      %v1692 = vpow.pop %v1691
      %v1693 = vmul.f32 %v1614, 1.442695
      %v1694 = vpow.pop %v1693
      %v1695 = vmul.f32 %v1615, 1.442695
      %v1696 = vpow.pop %v1695
      %v1697 = vmul.f32 %v1616, 1.442695
      %v1698 = vpow.pop %v1697
      %v1699 = vmul.f32 %v1617, 1.442695
      %v1700 = vpow.pop %v1699
      %v1701 = vmul.f32 %v1618, 1.442695
      %v1702 = vpow.pop %v1701
      %v1703 = vmul.f32 %v1619, 1.442695
      %v1704 = vpow.pop %v1703
      %v1705 = vmul.f32 %v1620, 1.442695
      %v1706 = vpow.pop %v1705
      %v1707 = vmul.f32 %v1621, 1.442695
      %v1708 = vpow.pop %v1707
      %v1709 = vmul.f32 %v1622, 1.442695
      %v1710 = vpow.pop %v1709
      %v1711 = vmul.f32 %v1623, 1.442695
      %v1712 = vpow.pop %v1711
      %v1713 = vmul.f32 %v1624, 1.442695
      %v1714 = vpow.pop %v1713
      %v1715 = vmul.f32 %v1625, 1.442695
      %v1716 = vpow.pop %v1715
      %v1717 = vmul.f32 %v1626, 1.442695
      %v1718 = vpow.pop %v1717
      %v1719 = vmul.f32 %v1627, 1.442695
      %v1720 = vpow.pop %v1719
      %v1721 = vmul.f32 %v1628, 1.442695
      %v1722 = vpow.pop %v1721
      %v1723 = vmul.f32 %v1629, 1.442695
      %v1724 = vpow.pop %v1723
      %v1725 = vmul.f32 %v1630, 1.442695
      %v1726 = vpow.pop %v1725
      %v1727 = vmul.f32 %v1631, 1.442695
      %v1728 = vpow.pop %v1727
      %v1729 = vmul.f32 %v1632, 1.442695
      %v1730 = vpow.pop %v1729
      %v1731 = vmul.f32 %v1633, 1.442695
      %v1732 = vpow.pop %v1731
      %v1733 = vmul.f32 %v1634, 1.442695
      %v1734 = vpow.pop %v1733
      %v1735 = vmul.f32 %v1635, 1.442695
      %v1736 = vpow.pop %v1735
      %v1737 = vmul.f32 %v1636, 1.442695
      %v1738 = vpow.pop %v1737
      %v1739 = vmul.f32 %v1637, 1.442695
      %v1740 = vpow.pop %v1739
      %v1741 = vmul.f32 %v1638, 1.442695
      %v1742 = vpow.pop %v1741
      %v1743 = vmul.f32 %v1639, 1.442695
      %v1744 = vpow.pop %v1743
      %v1745 = vmul.f32 %v1640, 1.442695
      %v1746 = vpow.pop %v1745
      %v1747 = vmul.f32 %v1641, 1.442695
      %v1748 = vpow.pop %v1747
      %v1749 = vmul.f32 %v1642, 1.442695
      %v1750 = vpow.pop %v1749
      %v1751 = vmul.f32 %v1643, 1.442695
      %v1752 = vpow.pop %v1751
      %v1753 = vmul.f32 %v1644, 1.442695
      %v1754 = vpow.pop %v1753
      %v1755 = vmul.f32 %v1645, 1.442695
      %v1756 = vpow.pop %v1755
      %v1757 = vmul.f32 %v1646, 1.442695
      %v1758 = vpow.pop %v1757
      %v1759 = vmul.f32 %v1647, 1.442695
      %v1760 = vpow.pop %v1759
      %v1761 = vmul.f32 %v1648, 1.442695
      %v1762 = vpow.pop %v1761
      %v1763 = vmul.f32 %v1649, 1.442695
      %v1764 = vpow.pop %v1763
      %v1765 = vmul.f32 %v1650, 1.442695
      %v1766 = vpow.pop %v1765
      %v1767 = vmul.f32 %v1651, 1.442695
      %v1768 = vpow.pop %v1767
      %v1769 = vmul.f32 %v1652, 1.442695
      %v1770 = vpow.pop %v1769
      %v1771 = vmul.f32 %v1653, 1.442695
      %v1772 = vpow.pop %v1771
      %v1773 = vmul.f32 %v1654, 1.442695
      %v1774 = vpow.pop %v1773
      %v1775 = vmul.f32 %v1655, 1.442695
      %v1776 = vpow.pop %v1775
      %v1777 = vmul.f32 %v1656, 1.442695
      %v1778 = vpow.pop %v1777
      %v1779 = vmul.f32 %v1657, 1.442695
      %v1780 = vpow.pop %v1779
      %v1781 = vmul.f32 %v1658, 1.442695
      %v1782 = vpow.pop %v1781
      %v1783 = vmul.f32 %v1659, 1.442695
      %v1784 = vpow.pop %v1783
      %v1785 = vmul.f32 %v1660, 1.442695
      %v1786 = vpow.pop %v1785
      %v1787 = vmul.f32 %v1661, 1.442695
      %v1788 = vpow.pop %v1787
      %v1789 = vmul.f32 %v1662, 1.442695
      %v1790 = vpow.pop %v1789
      %v1791 = vadd.f32 %v1664, 1.0
      %v1792 = vadd.f32 %v1666, 1.0
      %v1793 = vadd.f32 %v1668, 1.0
      %v1794 = vadd.f32 %v1670, 1.0
      %v1795 = vadd.f32 %v1672, 1.0
      %v1796 = vadd.f32 %v1674, 1.0
      %v1797 = vadd.f32 %v1676, 1.0
      %v1798 = vadd.f32 %v1678, 1.0
      %v1799 = vadd.f32 %v1680, 1.0
      %v1800 = vadd.f32 %v1682, 1.0
      %v1801 = vadd.f32 %v1684, 1.0
      %v1802 = vadd.f32 %v1686, 1.0
      %v1803 = vadd.f32 %v1688, 1.0
      %v1804 = vadd.f32 %v1690, 1.0
      %v1805 = vadd.f32 %v1692, 1.0
      %v1806 = vadd.f32 %v1694, 1.0
      %v1807 = vadd.f32 %v1696, 1.0
      %v1808 = vadd.f32 %v1698, 1.0
      %v1809 = vadd.f32 %v1700, 1.0
      %v1810 = vadd.f32 %v1702, 1.0
      %v1811 = vadd.f32 %v1704, 1.0
      %v1812 = vadd.f32 %v1706, 1.0
      %v1813 = vadd.f32 %v1708, 1.0
      %v1814 = vadd.f32 %v1710, 1.0
      %v1815 = vadd.f32 %v1712, 1.0
      %v1816 = vadd.f32 %v1714, 1.0
      %v1817 = vadd.f32 %v1716, 1.0
      %v1818 = vadd.f32 %v1718, 1.0
      %v1819 = vadd.f32 %v1720, 1.0
      %v1820 = vadd.f32 %v1722, 1.0
      %v1821 = vadd.f32 %v1724, 1.0
      %v1822 = vadd.f32 %v1726, 1.0
      %v1823 = vadd.f32 %v1728, 1.0
      %v1824 = vadd.f32 %v1730, 1.0
      %v1825 = vadd.f32 %v1732, 1.0
      %v1826 = vadd.f32 %v1734, 1.0
      %v1827 = vadd.f32 %v1736, 1.0
      %v1828 = vadd.f32 %v1738, 1.0
      %v1829 = vadd.f32 %v1740, 1.0
      %v1830 = vadd.f32 %v1742, 1.0
      %v1831 = vadd.f32 %v1744, 1.0
      %v1832 = vadd.f32 %v1746, 1.0
      %v1833 = vadd.f32 %v1748, 1.0
      %v1834 = vadd.f32 %v1750, 1.0
      %v1835 = vadd.f32 %v1752, 1.0
      %v1836 = vadd.f32 %v1754, 1.0
      %v1837 = vadd.f32 %v1756, 1.0
      %v1838 = vadd.f32 %v1758, 1.0
      %v1839 = vadd.f32 %v1760, 1.0
      %v1840 = vadd.f32 %v1762, 1.0
      %v1841 = vadd.f32 %v1764, 1.0
      %v1842 = vadd.f32 %v1766, 1.0
      %v1843 = vadd.f32 %v1768, 1.0
      %v1844 = vadd.f32 %v1770, 1.0
      %v1845 = vadd.f32 %v1772, 1.0
      %v1846 = vadd.f32 %v1774, 1.0
      %v1847 = vadd.f32 %v1776, 1.0
      %v1848 = vadd.f32 %v1778, 1.0
      %v1849 = vadd.f32 %v1780, 1.0
      %v1850 = vadd.f32 %v1782, 1.0
      %v1851 = vadd.f32 %v1784, 1.0
      %v1852 = vadd.f32 %v1786, 1.0
      %v1853 = vadd.f32 %v1788, 1.0
      %v1854 = vadd.f32 %v1790, 1.0
      %v1855 = vrcp.pop %v1791
      %v1856 = vmul.f32 1.0, %v1855
      %v1857 = vrcp.pop %v1792
      %v1858 = vmul.f32 1.0, %v1857
      %v1859 = vrcp.pop %v1793
      %v1860 = vmul.f32 1.0, %v1859
      %v1861 = vrcp.pop %v1794
      %v1862 = vmul.f32 1.0, %v1861
      %v1863 = vrcp.pop %v1795
      %v1864 = vmul.f32 1.0, %v1863
      %v1865 = vrcp.pop %v1796
      %v1866 = vmul.f32 1.0, %v1865
      %v1867 = vrcp.pop %v1797
      %v1868 = vmul.f32 1.0, %v1867
      %v1869 = vrcp.pop %v1798
      %v1870 = vmul.f32 1.0, %v1869
      %v1871 = vrcp.pop %v1799
      %v1872 = vmul.f32 1.0, %v1871
      %v1873 = vrcp.pop %v1800
      %v1874 = vmul.f32 1.0, %v1873
      %v1875 = vrcp.pop %v1801
      %v1876 = vmul.f32 1.0, %v1875
      %v1877 = vrcp.pop %v1802
      %v1878 = vmul.f32 1.0, %v1877
      %v1879 = vrcp.pop %v1803
      %v1880 = vmul.f32 1.0, %v1879
      %v1881 = vrcp.pop %v1804
      %v1882 = vmul.f32 1.0, %v1881
      %v1883 = vrcp.pop %v1805
      %v1884 = vmul.f32 1.0, %v1883
      %v1885 = vrcp.pop %v1806
      %v1886 = vmul.f32 1.0, %v1885
      %v1887 = vrcp.pop %v1807
      %v1888 = vmul.f32 1.0, %v1887
      %v1889 = vrcp.pop %v1808
      %v1890 = vmul.f32 1.0, %v1889
      %v1891 = vrcp.pop %v1809
      %v1892 = vmul.f32 1.0, %v1891
      %v1893 = vrcp.pop %v1810
      %v1894 = vmul.f32 1.0, %v1893
      %v1895 = vrcp.pop %v1811
      %v1896 = vmul.f32 1.0, %v1895
      %v1897 = vrcp.pop %v1812
      %v1898 = vmul.f32 1.0, %v1897
      %v1899 = vrcp.pop %v1813
      %v1900 = vmul.f32 1.0, %v1899
      %v1901 = vrcp.pop %v1814
      %v1902 = vmul.f32 1.0, %v1901
      %v1903 = vrcp.pop %v1815
      %v1904 = vmul.f32 1.0, %v1903
      %v1905 = vrcp.pop %v1816
      %v1906 = vmul.f32 1.0, %v1905
      %v1907 = vrcp.pop %v1817
      %v1908 = vmul.f32 1.0, %v1907
      %v1909 = vrcp.pop %v1818
      %v1910 = vmul.f32 1.0, %v1909
      %v1911 = vrcp.pop %v1819
      %v1912 = vmul.f32 1.0, %v1911
      %v1913 = vrcp.pop %v1820
      %v1914 = vmul.f32 1.0, %v1913
      %v1915 = vrcp.pop %v1821
      %v1916 = vmul.f32 1.0, %v1915
      %v1917 = vrcp.pop %v1822
      %v1918 = vmul.f32 1.0, %v1917
      %v1919 = vrcp.pop %v1823
      %v1920 = vmul.f32 1.0, %v1919
      %v1921 = vrcp.pop %v1824
      %v1922 = vmul.f32 1.0, %v1921
      %v1923 = vrcp.pop %v1825
      %v1924 = vmul.f32 1.0, %v1923
      %v1925 = vrcp.pop %v1826
      %v1926 = vmul.f32 1.0, %v1925
      %v1927 = vrcp.pop %v1827
      %v1928 = vmul.f32 1.0, %v1927
      %v1929 = vrcp.pop %v1828
      %v1930 = vmul.f32 1.0, %v1929
      %v1931 = vrcp.pop %v1829
      %v1932 = vmul.f32 1.0, %v1931
      %v1933 = vrcp.pop %v1830
      %v1934 = vmul.f32 1.0, %v1933
      %v1935 = vrcp.pop %v1831
      %v1936 = vmul.f32 1.0, %v1935
      %v1937 = vrcp.pop %v1832
      %v1938 = vmul.f32 1.0, %v1937
      %v1939 = vrcp.pop %v1833
      %v1940 = vmul.f32 1.0, %v1939
      %v1941 = vrcp.pop %v1834
      %v1942 = vmul.f32 1.0, %v1941
      %v1943 = vrcp.pop %v1835
      %v1944 = vmul.f32 1.0, %v1943
      %v1945 = vrcp.pop %v1836
      %v1946 = vmul.f32 1.0, %v1945
      %v1947 = vrcp.pop %v1837
      %v1948 = vmul.f32 1.0, %v1947
      %v1949 = vrcp.pop %v1838
      %v1950 = vmul.f32 1.0, %v1949
      %v1951 = vrcp.pop %v1839
      %v1952 = vmul.f32 1.0, %v1951
      %v1953 = vrcp.pop %v1840
      %v1954 = vmul.f32 1.0, %v1953
      %v1955 = vrcp.pop %v1841
      %v1956 = vmul.f32 1.0, %v1955
      %v1957 = vrcp.pop %v1842
      %v1958 = vmul.f32 1.0, %v1957
      %v1959 = vrcp.pop %v1843
      %v1960 = vmul.f32 1.0, %v1959
      %v1961 = vrcp.pop %v1844
      %v1962 = vmul.f32 1.0, %v1961
      %v1963 = vrcp.pop %v1845
      %v1964 = vmul.f32 1.0, %v1963
      %v1965 = vrcp.pop %v1846
      %v1966 = vmul.f32 1.0, %v1965
      %v1967 = vrcp.pop %v1847
      %v1968 = vmul.f32 1.0, %v1967
      %v1969 = vrcp.pop %v1848
      %v1970 = vmul.f32 1.0, %v1969
      %v1971 = vrcp.pop %v1849
      %v1972 = vmul.f32 1.0, %v1971
      %v1973 = vrcp.pop %v1850
      %v1974 = vmul.f32 1.0, %v1973
      %v1975 = vrcp.pop %v1851
      %v1976 = vmul.f32 1.0, %v1975
      %v1977 = vrcp.pop %v1852
      %v1978 = vmul.f32 1.0, %v1977
      %v1979 = vrcp.pop %v1853
      %v1980 = vmul.f32 1.0, %v1979
      %v1981 = vrcp.pop %v1854
      %v1982 = vmul.f32 1.0, %v1981
      %v1983 = vmul.f32 %v655, %v1856
      %v1984 = vmul.f32 %v656, %v1858
      %v1985 = vmul.f32 %v657, %v1860
      %v1986 = vmul.f32 %v658, %v1862
      %v1987 = vmul.f32 %v659, %v1864
      %v1988 = vmul.f32 %v660, %v1866
      %v1989 = vmul.f32 %v661, %v1868
      %v1990 = vmul.f32 %v662, %v1870
      %v1991 = vmul.f32 %v663, %v1872
      %v1992 = vmul.f32 %v664, %v1874
      %v1993 = vmul.f32 %v665, %v1876
      %v1994 = vmul.f32 %v666, %v1878
      %v1995 = vmul.f32 %v667, %v1880
      %v1996 = vmul.f32 %v668, %v1882
      %v1997 = vmul.f32 %v669, %v1884
      %v1998 = vmul.f32 %v670, %v1886
      %v1999 = vmul.f32 %v671, %v1888
      %v2000 = vmul.f32 %v672, %v1890
      %v2001 = vmul.f32 %v673, %v1892
      %v2002 = vmul.f32 %v674, %v1894
      %v2003 = vmul.f32 %v675, %v1896
      %v2004 = vmul.f32 %v676, %v1898
      %v2005 = vmul.f32 %v677, %v1900
      %v2006 = vmul.f32 %v678, %v1902
      %v2007 = vmul.f32 %v679, %v1904
      %v2008 = vmul.f32 %v680, %v1906
      %v2009 = vmul.f32 %v681, %v1908
      %v2010 = vmul.f32 %v682, %v1910
      %v2011 = vmul.f32 %v683, %v1912
      %v2012 = vmul.f32 %v684, %v1914
      %v2013 = vmul.f32 %v685, %v1916
      %v2014 = vmul.f32 %v686, %v1918
      %v2015 = vmul.f32 %v687, %v1920
      %v2016 = vmul.f32 %v688, %v1922
      %v2017 = vmul.f32 %v689, %v1924
      %v2018 = vmul.f32 %v690, %v1926
      %v2019 = vmul.f32 %v691, %v1928
      %v2020 = vmul.f32 %v692, %v1930
      %v2021 = vmul.f32 %v693, %v1932
      %v2022 = vmul.f32 %v694, %v1934
      %v2023 = vmul.f32 %v695, %v1936
      %v2024 = vmul.f32 %v696, %v1938
      %v2025 = vmul.f32 %v697, %v1940
      %v2026 = vmul.f32 %v698, %v1942
      %v2027 = vmul.f32 %v699, %v1944
      %v2028 = vmul.f32 %v700, %v1946
      %v2029 = vmul.f32 %v701, %v1948
      %v2030 = vmul.f32 %v702, %v1950
      %v2031 = vmul.f32 %v703, %v1952
      %v2032 = vmul.f32 %v704, %v1954
      %v2033 = vmul.f32 %v705, %v1956
      %v2034 = vmul.f32 %v706, %v1958
      %v2035 = vmul.f32 %v707, %v1960
      %v2036 = vmul.f32 %v708, %v1962
      %v2037 = vmul.f32 %v709, %v1964
      %v2038 = vmul.f32 %v710, %v1966
      %v2039 = vmul.f32 %v711, %v1968
      %v2040 = vmul.f32 %v712, %v1970
      %v2041 = vmul.f32 %v713, %v1972
      %v2042 = vmul.f32 %v714, %v1974
      %v2043 = vmul.f32 %v715, %v1976
      %v2044 = vmul.f32 %v716, %v1978
      %v2045 = vmul.f32 %v717, %v1980
      %v2046 = vmul.f32 %v718, %v1982
      %2047 = vadd.xlane.f32.xlu0 %v1983
      %v2048 = vpop.xlane.xlu0 %2047
      %2049 = vadd.xlane.f32.xlu0 %v1984
      %v2050 = vpop.xlane.xlu0 %2049
      %2051 = vadd.xlane.f32.xlu0 %v1985
      %v2052 = vpop.xlane.xlu0 %2051
      %2053 = vadd.xlane.f32.xlu0 %v1986
      %v2054 = vpop.xlane.xlu0 %2053
      %2055 = vadd.xlane.f32.xlu0 %v1987
      %v2056 = vpop.xlane.xlu0 %2055
      %2057 = vadd.xlane.f32.xlu0 %v1988
      %v2058 = vpop.xlane.xlu0 %2057
      %2059 = vadd.xlane.f32.xlu0 %v1989
      %v2060 = vpop.xlane.xlu0 %2059
      %2061 = vadd.xlane.f32.xlu0 %v1990
      %v2062 = vpop.xlane.xlu0 %2061
      %2063 = vadd.xlane.f32.xlu0 %v1991
      %v2064 = vpop.xlane.xlu0 %2063
      %2065 = vadd.xlane.f32.xlu0 %v1992
      %v2066 = vpop.xlane.xlu0 %2065
      %2067 = vadd.xlane.f32.xlu0 %v1993
      %v2068 = vpop.xlane.xlu0 %2067
      %2069 = vadd.xlane.f32.xlu0 %v1994
      %v2070 = vpop.xlane.xlu0 %2069
      %2071 = vadd.xlane.f32.xlu0 %v1995
      %v2072 = vpop.xlane.xlu0 %2071
      %2073 = vadd.xlane.f32.xlu0 %v1996
      %v2074 = vpop.xlane.xlu0 %2073
      %2075 = vadd.xlane.f32.xlu0 %v1997
      %v2076 = vpop.xlane.xlu0 %2075
      %2077 = vadd.xlane.f32.xlu0 %v1998
      %v2078 = vpop.xlane.xlu0 %2077
      %2079 = vadd.xlane.f32.xlu0 %v1999
      %v2080 = vpop.xlane.xlu0 %2079
      %2081 = vadd.xlane.f32.xlu0 %v2000
      %v2082 = vpop.xlane.xlu0 %2081
      %2083 = vadd.xlane.f32.xlu0 %v2001
      %v2084 = vpop.xlane.xlu0 %2083
      %2085 = vadd.xlane.f32.xlu0 %v2002
      %v2086 = vpop.xlane.xlu0 %2085
      %2087 = vadd.xlane.f32.xlu0 %v2003
      %v2088 = vpop.xlane.xlu0 %2087
      %2089 = vadd.xlane.f32.xlu0 %v2004
      %v2090 = vpop.xlane.xlu0 %2089
      %2091 = vadd.xlane.f32.xlu0 %v2005
      %v2092 = vpop.xlane.xlu0 %2091
      %2093 = vadd.xlane.f32.xlu0 %v2006
      %v2094 = vpop.xlane.xlu0 %2093
      %2095 = vadd.xlane.f32.xlu0 %v2007
      %v2096 = vpop.xlane.xlu0 %2095
      %2097 = vadd.xlane.f32.xlu0 %v2008
      %v2098 = vpop.xlane.xlu0 %2097
      %2099 = vadd.xlane.f32.xlu0 %v2009
      %v2100 = vpop.xlane.xlu0 %2099
      %2101 = vadd.xlane.f32.xlu0 %v2010
      %v2102 = vpop.xlane.xlu0 %2101
      %2103 = vadd.xlane.f32.xlu0 %v2011
      %v2104 = vpop.xlane.xlu0 %2103
      %2105 = vadd.xlane.f32.xlu0 %v2012
      %v2106 = vpop.xlane.xlu0 %2105
      %2107 = vadd.xlane.f32.xlu0 %v2013
      %v2108 = vpop.xlane.xlu0 %2107
      %2109 = vadd.xlane.f32.xlu0 %v2014
      %v2110 = vpop.xlane.xlu0 %2109
      %2111 = vadd.xlane.f32.xlu0 %v2015
      %v2112 = vpop.xlane.xlu0 %2111
      %2113 = vadd.xlane.f32.xlu0 %v2016
      %v2114 = vpop.xlane.xlu0 %2113
      %2115 = vadd.xlane.f32.xlu0 %v2017
      %v2116 = vpop.xlane.xlu0 %2115
      %2117 = vadd.xlane.f32.xlu0 %v2018
      %v2118 = vpop.xlane.xlu0 %2117
      %2119 = vadd.xlane.f32.xlu0 %v2019
      %v2120 = vpop.xlane.xlu0 %2119
      %2121 = vadd.xlane.f32.xlu0 %v2020
      %v2122 = vpop.xlane.xlu0 %2121
      %2123 = vadd.xlane.f32.xlu0 %v2021
      %v2124 = vpop.xlane.xlu0 %2123
      %2125 = vadd.xlane.f32.xlu0 %v2022
      %v2126 = vpop.xlane.xlu0 %2125
      %2127 = vadd.xlane.f32.xlu0 %v2023
      %v2128 = vpop.xlane.xlu0 %2127
      %2129 = vadd.xlane.f32.xlu0 %v2024
      %v2130 = vpop.xlane.xlu0 %2129
      %2131 = vadd.xlane.f32.xlu0 %v2025
      %v2132 = vpop.xlane.xlu0 %2131
      %2133 = vadd.xlane.f32.xlu0 %v2026
      %v2134 = vpop.xlane.xlu0 %2133
      %2135 = vadd.xlane.f32.xlu0 %v2027
      %v2136 = vpop.xlane.xlu0 %2135
      %2137 = vadd.xlane.f32.xlu0 %v2028
      %v2138 = vpop.xlane.xlu0 %2137
      %2139 = vadd.xlane.f32.xlu0 %v2029
      %v2140 = vpop.xlane.xlu0 %2139
      %2141 = vadd.xlane.f32.xlu0 %v2030
      %v2142 = vpop.xlane.xlu0 %2141
      %2143 = vadd.xlane.f32.xlu0 %v2031
      %v2144 = vpop.xlane.xlu0 %2143
      %2145 = vadd.xlane.f32.xlu0 %v2032
      %v2146 = vpop.xlane.xlu0 %2145
      %2147 = vadd.xlane.f32.xlu0 %v2033
      %v2148 = vpop.xlane.xlu0 %2147
      %2149 = vadd.xlane.f32.xlu0 %v2034
      %v2150 = vpop.xlane.xlu0 %2149
      %2151 = vadd.xlane.f32.xlu0 %v2035
      %v2152 = vpop.xlane.xlu0 %2151
      %2153 = vadd.xlane.f32.xlu0 %v2036
      %v2154 = vpop.xlane.xlu0 %2153
      %2155 = vadd.xlane.f32.xlu0 %v2037
      %v2156 = vpop.xlane.xlu0 %2155
      %2157 = vadd.xlane.f32.xlu0 %v2038
      %v2158 = vpop.xlane.xlu0 %2157
      %2159 = vadd.xlane.f32.xlu0 %v2039
      %v2160 = vpop.xlane.xlu0 %2159
      %2161 = vadd.xlane.f32.xlu0 %v2040
      %v2162 = vpop.xlane.xlu0 %2161
      %2163 = vadd.xlane.f32.xlu0 %v2041
      %v2164 = vpop.xlane.xlu0 %2163
      %2165 = vadd.xlane.f32.xlu0 %v2042
      %v2166 = vpop.xlane.xlu0 %2165
      %2167 = vadd.xlane.f32.xlu0 %v2043
      %v2168 = vpop.xlane.xlu0 %2167
      %2169 = vadd.xlane.f32.xlu0 %v2044
      %v2170 = vpop.xlane.xlu0 %2169
      %2171 = vadd.xlane.f32.xlu0 %v2045
      %v2172 = vpop.xlane.xlu0 %2171
      %2173 = vadd.xlane.f32.xlu0 %v2046
      %v2174 = vpop.xlane.xlu0 %2173
      %v2175 = vmul.f32 %v2048, 0.03125
      %v2176 = vmul.f32 %v2050, 0.03125
      %v2177 = vmul.f32 %v2052, 0.03125
      %v2178 = vmul.f32 %v2054, 0.03125
      %v2179 = vmul.f32 %v2056, 0.03125
      %v2180 = vmul.f32 %v2058, 0.03125
      %v2181 = vmul.f32 %v2060, 0.03125
      %v2182 = vmul.f32 %v2062, 0.03125
      %v2183 = vmul.f32 %v2064, 0.03125
      %v2184 = vmul.f32 %v2066, 0.03125
      %v2185 = vmul.f32 %v2068, 0.03125
      %v2186 = vmul.f32 %v2070, 0.03125
      %v2187 = vmul.f32 %v2072, 0.03125
      %v2188 = vmul.f32 %v2074, 0.03125
      %v2189 = vmul.f32 %v2076, 0.03125
      %v2190 = vmul.f32 %v2078, 0.03125
      %v2191 = vmul.f32 %v2080, 0.03125
      %v2192 = vmul.f32 %v2082, 0.03125
      %v2193 = vmul.f32 %v2084, 0.03125
      %v2194 = vmul.f32 %v2086, 0.03125
      %v2195 = vmul.f32 %v2088, 0.03125
      %v2196 = vmul.f32 %v2090, 0.03125
      %v2197 = vmul.f32 %v2092, 0.03125
      %v2198 = vmul.f32 %v2094, 0.03125
      %v2199 = vmul.f32 %v2096, 0.03125
      %v2200 = vmul.f32 %v2098, 0.03125
      %v2201 = vmul.f32 %v2100, 0.03125
      %v2202 = vmul.f32 %v2102, 0.03125
      %v2203 = vmul.f32 %v2104, 0.03125
      %v2204 = vmul.f32 %v2106, 0.03125
      %v2205 = vmul.f32 %v2108, 0.03125
      %v2206 = vmul.f32 %v2110, 0.03125
      %v2207 = vmul.f32 %v2112, 0.03125
      %v2208 = vmul.f32 %v2114, 0.03125
      %v2209 = vmul.f32 %v2116, 0.03125
      %v2210 = vmul.f32 %v2118, 0.03125
      %v2211 = vmul.f32 %v2120, 0.03125
      %v2212 = vmul.f32 %v2122, 0.03125
      %v2213 = vmul.f32 %v2124, 0.03125
      %v2214 = vmul.f32 %v2126, 0.03125
      %v2215 = vmul.f32 %v2128, 0.03125
      %v2216 = vmul.f32 %v2130, 0.03125
      %v2217 = vmul.f32 %v2132, 0.03125
      %v2218 = vmul.f32 %v2134, 0.03125
      %v2219 = vmul.f32 %v2136, 0.03125
      %v2220 = vmul.f32 %v2138, 0.03125
      %v2221 = vmul.f32 %v2140, 0.03125
      %v2222 = vmul.f32 %v2142, 0.03125
      %v2223 = vmul.f32 %v2144, 0.03125
      %v2224 = vmul.f32 %v2146, 0.03125
      %v2225 = vmul.f32 %v2148, 0.03125
      %v2226 = vmul.f32 %v2150, 0.03125
      %v2227 = vmul.f32 %v2152, 0.03125
      %v2228 = vmul.f32 %v2154, 0.03125
      %v2229 = vmul.f32 %v2156, 0.03125
      %v2230 = vmul.f32 %v2158, 0.03125
      %v2231 = vmul.f32 %v2160, 0.03125
      %v2232 = vmul.f32 %v2162, 0.03125
      %v2233 = vmul.f32 %v2164, 0.03125
      %v2234 = vmul.f32 %v2166, 0.03125
      %v2235 = vmul.f32 %v2168, 0.03125
      %v2236 = vmul.f32 %v2170, 0.03125
      %v2237 = vmul.f32 %v2172, 0.03125
      %v2238 = vmul.f32 %v2174, 0.03125
      %vm2239 = vcmask 7168
      %2240 = vst.msk [vmem:[%s253] sm:$0xff] %vm2239, %v2175
      %2241 = vst.msk [vmem:[%s253 + $0x8] sm:$0xff] %vm2239, %v2176
      %2242 = vst.msk [vmem:[%s253 + $0x10] sm:$0xff] %vm2239, %v2177
      %2243 = vst.msk [vmem:[%s253 + $0x18] sm:$0xff] %vm2239, %v2178
      %2244 = vst.msk [vmem:[%s253 + $0x20] sm:$0xff] %vm2239, %v2179
      %2245 = vst.msk [vmem:[%s253 + $0x28] sm:$0xff] %vm2239, %v2180
      %2246 = vst.msk [vmem:[%s253 + $0x30] sm:$0xff] %vm2239, %v2181
      %2247 = vst.msk [vmem:[%s253 + $0x38] sm:$0xff] %vm2239, %v2182
      %2248 = vst.msk [vmem:[%s253 + $0x40] sm:$0xff] %vm2239, %v2183
      %2249 = vst.msk [vmem:[%s253 + $0x48] sm:$0xff] %vm2239, %v2184
      %2250 = vst.msk [vmem:[%s253 + $0x50] sm:$0xff] %vm2239, %v2185
      %2251 = vst.msk [vmem:[%s253 + $0x58] sm:$0xff] %vm2239, %v2186
      %2252 = vst.msk [vmem:[%s253 + $0x60] sm:$0xff] %vm2239, %v2187
      %2253 = vst.msk [vmem:[%s253 + $0x68] sm:$0xff] %vm2239, %v2188
      %2254 = vst.msk [vmem:[%s253 + $0x70] sm:$0xff] %vm2239, %v2189
      %2255 = vst.msk [vmem:[%s253 + $0x78] sm:$0xff] %vm2239, %v2190
      %2256 = vst.msk [vmem:[%s253 + $0x80] sm:$0xff] %vm2239, %v2191
      %2257 = vst.msk [vmem:[%s253 + $0x88] sm:$0xff] %vm2239, %v2192
      %2258 = vst.msk [vmem:[%s253 + $0x90] sm:$0xff] %vm2239, %v2193
      %2259 = vst.msk [vmem:[%s253 + $0x98] sm:$0xff] %vm2239, %v2194
      %2260 = vst.msk [vmem:[%s253 + $0xa0] sm:$0xff] %vm2239, %v2195
      %2261 = vst.msk [vmem:[%s253 + $0xa8] sm:$0xff] %vm2239, %v2196
      %2262 = vst.msk [vmem:[%s253 + $0xb0] sm:$0xff] %vm2239, %v2197
      %2263 = vst.msk [vmem:[%s253 + $0xb8] sm:$0xff] %vm2239, %v2198
      %2264 = vst.msk [vmem:[%s253 + $0xc0] sm:$0xff] %vm2239, %v2199
      %2265 = vst.msk [vmem:[%s253 + $0xc8] sm:$0xff] %vm2239, %v2200
      %2266 = vst.msk [vmem:[%s253 + $0xd0] sm:$0xff] %vm2239, %v2201
      %2267 = vst.msk [vmem:[%s253 + $0xd8] sm:$0xff] %vm2239, %v2202
      %2268 = vst.msk [vmem:[%s253 + $0xe0] sm:$0xff] %vm2239, %v2203
      %2269 = vst.msk [vmem:[%s253 + $0xe8] sm:$0xff] %vm2239, %v2204
      %2270 = vst.msk [vmem:[%s253 + $0xf0] sm:$0xff] %vm2239, %v2205
      %2271 = vst.msk [vmem:[%s253 + $0xf8] sm:$0xff] %vm2239, %v2206
      %2272 = vst.msk [vmem:[%s253 + $0x100] sm:$0xff] %vm2239, %v2207
      %2273 = vst.msk [vmem:[%s253 + $0x108] sm:$0xff] %vm2239, %v2208
      %2274 = vst.msk [vmem:[%s253 + $0x110] sm:$0xff] %vm2239, %v2209
      %2275 = vst.msk [vmem:[%s253 + $0x118] sm:$0xff] %vm2239, %v2210
      %2276 = vst.msk [vmem:[%s253 + $0x120] sm:$0xff] %vm2239, %v2211
      %2277 = vst.msk [vmem:[%s253 + $0x128] sm:$0xff] %vm2239, %v2212
      %2278 = vst.msk [vmem:[%s253 + $0x130] sm:$0xff] %vm2239, %v2213
      %2279 = vst.msk [vmem:[%s253 + $0x138] sm:$0xff] %vm2239, %v2214
      %2280 = vst.msk [vmem:[%s253 + $0x140] sm:$0xff] %vm2239, %v2215
      %2281 = vst.msk [vmem:[%s253 + $0x148] sm:$0xff] %vm2239, %v2216
      %2282 = vst.msk [vmem:[%s253 + $0x150] sm:$0xff] %vm2239, %v2217
      %2283 = vst.msk [vmem:[%s253 + $0x158] sm:$0xff] %vm2239, %v2218
      %2284 = vst.msk [vmem:[%s253 + $0x160] sm:$0xff] %vm2239, %v2219
      %2285 = vst.msk [vmem:[%s253 + $0x168] sm:$0xff] %vm2239, %v2220
      %2286 = vst.msk [vmem:[%s253 + $0x170] sm:$0xff] %vm2239, %v2221
      %2287 = vst.msk [vmem:[%s253 + $0x178] sm:$0xff] %vm2239, %v2222
      %2288 = vst.msk [vmem:[%s253 + $0x180] sm:$0xff] %vm2239, %v2223
      %2289 = vst.msk [vmem:[%s253 + $0x188] sm:$0xff] %vm2239, %v2224
      %2290 = vst.msk [vmem:[%s253 + $0x190] sm:$0xff] %vm2239, %v2225
      %2291 = vst.msk [vmem:[%s253 + $0x198] sm:$0xff] %vm2239, %v2226
      %2292 = vst.msk [vmem:[%s253 + $0x1a0] sm:$0xff] %vm2239, %v2227
      %2293 = vst.msk [vmem:[%s253 + $0x1a8] sm:$0xff] %vm2239, %v2228
      %2294 = vst.msk [vmem:[%s253 + $0x1b0] sm:$0xff] %vm2239, %v2229
      %2295 = vst.msk [vmem:[%s253 + $0x1b8] sm:$0xff] %vm2239, %v2230
      %2296 = vst.msk [vmem:[%s253 + $0x1c0] sm:$0xff] %vm2239, %v2231
      %2297 = vst.msk [vmem:[%s253 + $0x1c8] sm:$0xff] %vm2239, %v2232
      %2298 = vst.msk [vmem:[%s253 + $0x1d0] sm:$0xff] %vm2239, %v2233
      %2299 = vst.msk [vmem:[%s253 + $0x1d8] sm:$0xff] %vm2239, %v2234
      %2300 = vst.msk [vmem:[%s253 + $0x1e0] sm:$0xff] %vm2239, %v2235
      %2301 = vst.msk [vmem:[%s253 + $0x1e8] sm:$0xff] %vm2239, %v2236
      %2302 = vst.msk [vmem:[%s253 + $0x1f0] sm:$0xff] %vm2239, %v2237
      %2303 = vst.msk [vmem:[%s253 + $0x1f8] sm:$0xff] %vm2239, %v2238
      %s2304 = smul.u32 64, %s17
      %p2305 = scmp.lt.s32.totalorder %s2304, 127
      %s2306 = scalar_select %p2305, %s2304, 127
      %s2307 = smul.addr %s2306, 8
      %s2308 = scalar_lea.vmem %s6, %s2307
      // Predicated region
      $region45: #{tpu_custom_call.1} parent=43 // pred_check
        %p2309 = pneg %p166
      $region46: #{tpu_custom_call.1} parent=43 // pred_check_branch
        %2311 = sbr.rel (%p2309) target = $region48
      $region47: #{tpu_custom_call.1} parent=43 // pred_region
        %s2312 = smul.u32 64, %s17
      $region48: #{tpu_custom_call.1} parent=43 // pred_fallthru
        _
    $region44: #{tpu_custom_call.1} parent=5 // pred_fallthru
      _
    %p2313 = scmp.le.s32.totalorder 2, %s12
    // Predicated region
    $region49: #{tpu_custom_call.1} parent=5 // pred_check
      %p2314 = pneg %p2313
    $region50: #{tpu_custom_call.1} parent=5 // pred_check_branch
      %2316 = sbr.rel (%p2314) target = $region52
    $region51: #{tpu_custom_call.1} parent=5 // pred_region
      %s2317 = ssub.s32 %s12, 2
      // Predicated region
      $region53: #{tpu_custom_call.1} parent=51 // pred_check
        %p2318 = pneg %p172
      $region54: #{tpu_custom_call.1} parent=51 // pred_check_branch
        %2320 = sbr.rel (%p2318) target = $region56
      $region55: #{tpu_custom_call.1} parent=51 // pred_region
        %s2321 = smul.u32 64, %s18
        %p2322 = scmp.lt.s32.totalorder %s2321, 127
        %s2323 = scalar_select %p2322, %s2321, 127
        %s2324 = smul.addr %s2323, 8
        %s2325 = scalar_lea.vmem %s6, %s2324
      $region56: #{tpu_custom_call.1} parent=51 // pred_fallthru
        _
    $region52: #{tpu_custom_call.1} parent=5 // pred_fallthru
      _
  $region6: #{tpu_custom_call.1} parent=0 // loop_footer
    %s16 = sadd.s32 1, %s12
  $region7: #{tpu_custom_call.1} parent=0 // loop_footer_branch
    %11 = sbr.rel target = $region3
  $region8: #{tpu_custom_call.1} parent=0 // loop_exit
    _

</llo_original>
